<compile_context>
chip_gen: v5e
topology: v5e:2x2
jax: 0.10.0
libtpu: 0.0.40
codegen_flags: <defaults>
</compile_context>

<pallas_src>
import functools

import jax
import jax.numpy as jnp
from jax import lax
from jax.experimental import pallas as pl
from jax.experimental.pallas import tpu as pltpu


def _variance_predictor_kernel(T, K, DIL, PAD, compute_dtype,
                               x_ref, mask_ref, ctrl_ref,
                               w1_ref, b1_ref, g1_ref, be1_ref,
                               w2_ref, b2_ref, g2_ref, be2_ref,
                               wl_ref, bl_ref,
                               out_ref,
                               xpad_s, hpad_s):
    eps = 1e-5
    Bb = x_ref.shape[0]
    C_in = xpad_s.shape[2]            # = encoder_hidden + 1 (control appended)
    C_f = w1_ref.shape[2]
    M = Bb * T

    # ---- one-time init: pad rows + grid-constant control lane --------------
    # The scratch buffers persist across grid steps; the pad rows and the
    # control lane are never overwritten by per-step data, so writing them
    # only at step 0 is safe and removes 4+ masked stores per iteration.
    @pl.when(pl.program_id(0) == 0)
    def _init():
        if PAD > 0:
            xpad_s[:, :PAD, :] = jnp.zeros((Bb, PAD, C_in), compute_dtype)
            xpad_s[:, PAD + T:, :] = jnp.zeros((Bb, PAD, C_in), compute_dtype)
            hpad_s[:, :PAD, :] = jnp.zeros((Bb, PAD, C_f), compute_dtype)
            hpad_s[:, PAD + T:, :] = jnp.zeros((Bb, PAD, C_f), compute_dtype)
        ctrl = ctrl_ref[0, 0]                                  # scalar (SMEM)
        xpad_s[:, PAD:PAD + T, C_in - 1:] = jnp.full((Bb, T, 1), ctrl,
                                                     compute_dtype)

    # ---- stage this step's encoder block (single f32 -> bf16 cast) ---------
    xpad_s[:, PAD:PAD + T, :C_in - 1] = x_ref[...].astype(compute_dtype)

    # ---- conv1d_1: K dilation-shifted taps, accumulated MXU matmuls --------
    acc = None
    for k in range(K):
        tap = xpad_s[:, k * DIL:k * DIL + T, :].reshape(M, C_in)
        p = jnp.dot(tap, w1_ref[k], preferred_element_type=jnp.float32)
        acc = p if acc is None else acc + p
    h = jnp.maximum(acc + b1_ref[...], 0.0)                    # bias + ReLU (f32)

    # ---- layer_norm_1 over channels (f32); E[x^2]-mu^2 so the two lane
    #      reductions are independent ----------------------------------------
    mu = jnp.mean(h, axis=-1, keepdims=True)
    ex2 = jnp.mean(h * h, axis=-1, keepdims=True)
    h = (h - mu) * lax.rsqrt(ex2 - mu * mu + eps) * g1_ref[...] + be1_ref[...]
    # dropout_1: identity at inference time

    # ---- stage conv2 input (single cast), then conv1d_2 --------------------
    hpad_s[:, PAD:PAD + T, :] = h.reshape(Bb, T, C_f).astype(compute_dtype)

    acc2 = None
    for k in range(K):
        tap = hpad_s[:, k * DIL:k * DIL + T, :].reshape(M, C_f)
        p = jnp.dot(tap, w2_ref[k], preferred_element_type=jnp.float32)
        acc2 = p if acc2 is None else acc2 + p
    h2 = jnp.maximum(acc2 + b2_ref[...], 0.0)

    # ---- layer_norm_2 (f32) -------------------------------------------------
    mu2 = jnp.mean(h2, axis=-1, keepdims=True)
    ex22 = jnp.mean(h2 * h2, axis=-1, keepdims=True)
    h2 = (h2 - mu2) * lax.rsqrt(ex22 - mu2 * mu2 + eps) * g2_ref[...] + be2_ref[...]
    # dropout_2: identity at inference time

    # ---- linear_layer (C_f -> 1): VPU multiply + lane reduction -------------
    h2 = h2.reshape(Bb, T, C_f)
    o = jnp.sum(h2 * wl_ref[...], axis=-1) + bl_ref[0, 0]      # (Bb, T)

    # ---- masked_fill(mask, 0.0); lane-dense store (T on the 128-lane axis) --
    out_ref[...] = jnp.where(mask_ref[...] > 0.5, 0.0, o[:, None, :])


def _padded_vmem_bytes(shape, dtype):
    """Bytes of one VMEM tile after (sublane, lane) padding."""
    it = jnp.dtype(dtype).itemsize
    sub = {4: 8, 2: 16, 1: 32}.get(it, 8)
    dims = [int(d) for d in shape]
    if len(dims) >= 1:
        dims[-1] = -(-dims[-1] // 128) * 128
    if len(dims) >= 2:
        dims[-2] = -(-dims[-2] // sub) * sub
    total = it
    for d in dims:
        total *= d
    return total


def variance_predictor_forward(encoder_output, mask, control, params,
                               kernel_size, dilation, *,
                               compute_dtype=jnp.bfloat16, batch_block=None):
    """encoder_output: (B, T, H) f32, mask: (B, T) bool, control: scalar.

    Returns (B, T) f32, matching VariancePredictor.forward in eval mode.
    """
    B, T, H = encoder_output.shape
    # 'same' padding (stride=1) is symmetric only for odd kernels.
    assert kernel_size % 2 == 1, "even kernel_size needs asymmetric padding"
    # TODO(synk): even kernel sizes would need asymmetric 'same' padding.
    pad = dilation * (kernel_size - 1) // 2
    T_pad = T + 2 * pad

    C_in = H + 1                              # control channel appended in-kernel
    C_f = params["w1"].shape[-1]
    K = kernel_size

    # Fold batch elements into each grid step so the conv matmuls get a
    # reasonable M (= Bb*T, target ~512 rows to amortize per-step overhead on
    # v5e/v6e), while keeping >= 2 grid steps when B >= 2 so the "parallel"
    # grid axis can shard across both v7x TensorCores.  Keep Bb = 1 when T is
    # not a multiple of 8 so the (Bb,T,C) <-> (Bb*T,C) reshapes stay trivial.
    if batch_block is None:
        if T % 8 == 0:
            cap = max(1, 512 // T)
            if B >= 2:
                cap = min(cap, B // 2)        # >= 2 grid steps (v7x megacore)
            cap = max(cap, 1)
            batch_block = 1
            for d in range(1, B + 1):
                if B % d == 0 and d <= cap:
                    batch_block = d
        else:
            batch_block = 1
    Bb = batch_block
    assert B % Bb == 0, (B, Bb)

    # Weights: (K, C, C_f) in compute_dtype -> one static-index slice per tap.
    w1c = params["w1"].astype(compute_dtype)               # (K, C_in, C_f)
    w2c = params["w2"].astype(compute_dtype)               # (K, C_f,  C_f)
    wl_row = params["wl"].reshape(1, C_f)                  # final linear on VPU
    ctrl = jnp.asarray(control, jnp.float32).reshape(1, 1)
    bl = params["bl"].reshape(1, 1)

    # Lane-dense mask / output: keep T on the 128-lane axis.  The size-1 middle
    # dim keeps the last two block dims equal to the full array dims for any
    # Bb; the trailing [:, 0, :] is a free reshape, not a data copy.
    mask_f = mask.astype(jnp.float32)[:, None, :]          # (B, 1, T)

    kern = functools.partial(_variance_predictor_kernel,
                             T, K, dilation, pad, compute_dtype)

    def const_spec(shape):
        n = len(shape)
        return pl.BlockSpec(shape, lambda b, _n=n: (0,) * _n)

    smem_spec = pl.BlockSpec(memory_space=pltpu.MemorySpace.SMEM)

    # VMEM footprint estimate (double-buffered blocks + persistent scratch),
    # used to set vmem_limit_bytes (matters on v7x's 64 MiB VMEM and v5e's
    # 16 MiB scoped default).
    block_shapes = [
        ((Bb, T, H), jnp.float32),            # encoder block
        ((Bb, 1, T), jnp.float32),            # mask block
        ((K, C_in, C_f), compute_dtype),      # conv1 weights
        ((1, C_f), jnp.float32), ((1, C_f), jnp.float32), ((1, C_f), jnp.float32),
        ((K, C_f, C_f), compute_dtype),       # conv2 weights
        ((1, C_f), jnp.float32), ((1, C_f), jnp.float32), ((1, C_f), jnp.float32),
        ((1, C_f), jnp.float32),              # linear weight row
        ((Bb, 1, T), jnp.float32),            # output block
    ]
    scratch_bytes = (_padded_vmem_bytes((Bb, T_pad, C_in), compute_dtype)
                     + _padded_vmem_bytes((Bb, T_pad, C_f), compute_dtype))
    est = 2 * sum(_padded_vmem_bytes(s, d) for s, d in block_shapes) + scratch_bytes
    vmem_limit = int(min(64 << 20, max(32 << 20, 2 * est + (2 << 20))))

    # NOTE: at production C_f (e.g. 256), single-buffering the constant-index
    # weight specs (pipeline_mode=pl.Buffered(1)) frees ~0.75-1.5 MiB more VMEM
    # headroom; left off here pending verification on the target jax version.
    out = pl.pallas_call(
        kern,
        out_shape=jax.ShapeDtypeStruct((B, 1, T), jnp.float32),
        grid=(B // Bb,),
        in_specs=[
            pl.BlockSpec((Bb, T, H), lambda b: (b, 0, 0)),    # encoder output
            pl.BlockSpec((Bb, 1, T), lambda b: (b, 0, 0)),    # padding mask
            smem_spec,                                        # control scalar
            const_spec((K, C_in, C_f)),                       # conv1 W
            const_spec((1, C_f)), const_spec((1, C_f)), const_spec((1, C_f)),
            const_spec((K, C_f, C_f)),                        # conv2 W
            const_spec((1, C_f)), const_spec((1, C_f)), const_spec((1, C_f)),
            const_spec((1, C_f)),                             # linear W row
            smem_spec,                                        # linear bias scalar
        ],
        out_specs=pl.BlockSpec((Bb, 1, T), lambda b: (b, 0, 0)),
        scratch_shapes=[
            pltpu.VMEM((Bb, T_pad, C_in), compute_dtype),     # padded input
            pltpu.VMEM((Bb, T_pad, C_f), compute_dtype),      # padded hidden
        ],
        compiler_params=pltpu.CompilerParams(
            dimension_semantics=("parallel",),
            vmem_limit_bytes=vmem_limit),
    )(encoder_output, mask_f, ctrl,
      w1c, params["b1"], params["g1"], params["be1"],
      w2c, params["b2"], params["g2"], params["be2"],
      wl_row, bl)
    return out[:, 0, :]                                        # (B, T)


def init_params(key, C_in, C_f, K):
    ks = jax.random.split(key, 6)
    s1 = 1.0 / (C_in * K) ** 0.5
    s2 = 1.0 / (C_f * K) ** 0.5
    return dict(
        w1=s1 * jax.random.normal(ks[0], (K, C_in, C_f), jnp.float32),
        b1=0.01 * jax.random.normal(ks[1], (1, C_f), jnp.float32),
        g1=jnp.ones((1, C_f), jnp.float32),
        be1=jnp.zeros((1, C_f), jnp.float32),
        w2=s2 * jax.random.normal(ks[2], (K, C_f, C_f), jnp.float32),
        b2=0.01 * jax.random.normal(ks[3], (1, C_f), jnp.float32),
        g2=jnp.ones((1, C_f), jnp.float32),
        be2=jnp.zeros((1, C_f), jnp.float32),
        wl=(1.0 / C_f ** 0.5) * jax.random.normal(ks[4], (C_f, 1), jnp.float32),
        bl=0.01 * jax.random.normal(ks[5], (1, 1), jnp.float32),
    )


def reference_forward(encoder_output, mask, control, params, K, dil):
    """Pure-JAX f32 reference matching the PyTorch forward (eval mode)."""
    B, T, H = encoder_output.shape
    x = jnp.concatenate(
        [encoder_output,
         jnp.broadcast_to(jnp.asarray(control, encoder_output.dtype), (B, T, 1))],
        axis=-1)
    pad = dil * (K - 1) // 2

    def conv(x, w, b):
        xp = jnp.pad(x, ((0, 0), (pad, pad), (0, 0)))
        out = jnp.broadcast_to(b[None, None, :], (B, T, w.shape[-1]))
        for k in range(K):
            out = out + jnp.einsum("btc,cd->btd", xp[:, k * dil:k * dil + T, :], w[k])
        return out

    def ln(h, g, be):
        mu = jnp.mean(h, -1, keepdims=True)
        var = jnp.mean((h - mu) ** 2, -1, keepdims=True)
        return (h - mu) / jnp.sqrt(var + 1e-5) * g + be

    h = ln(jnp.maximum(conv(x, params["w1"], params["b1"][0]), 0.0),
           params["g1"][0], params["be1"][0])
    h = ln(jnp.maximum(conv(h, params["w2"], params["b2"][0]), 0.0),
           params["g2"][0], params["be2"][0])
    o = (h @ params["wl"])[..., 0] + params["bl"][0, 0]
    return jnp.where(mask, 0.0, o)


if __name__ == "__main__":
    key = jax.random.PRNGKey(0)
    k_enc, k_mask, k_par = jax.random.split(key, 3)

    # small config: encoder_hidden=31 -> input_size=32 ; filter_size cfg=31 -> 32
    B, T = 2, 16
    encoder_hidden = 31
    filter_cfg = 31
    kernel_size, dilation = 3, 1
    C_in = encoder_hidden + 1
    C_f = filter_cfg + 1

    encoder_output = jax.random.normal(k_enc, (B, T, encoder_hidden), jnp.float32)
    mask = jax.random.uniform(k_mask, (B, T)) > 0.7      # bool padding mask
    control = 1.0

    params = init_params(k_par, C_in, C_f, kernel_size)
    ref = reference_forward(encoder_output, mask, control, params,
                            kernel_size, dilation)

    # f32 MXU path: tight check against the pure-JAX reference.
    out_f32 = variance_predictor_forward(encoder_output, mask, control, params,
                                         kernel_size, dilation,
                                         compute_dtype=jnp.float32)
    out_f32 = jax.block_until_ready(out_f32)
    assert out_f32.shape == (B, T)
    assert jnp.allclose(out_f32, ref, atol=1e-3, rtol=1e-3), \
        float(jnp.max(jnp.abs(out_f32 - ref)))

    # Default bf16 path (bf16 weights + bf16 staged activations, f32
    # accumulation / LayerNorm): looser tolerance from the bf16 mantissa.
    out_bf16 = variance_predictor_forward(encoder_output, mask, control, params,
                                          kernel_size, dilation)
    out_bf16 = jax.block_until_ready(out_bf16)
    assert out_bf16.shape == (B, T)
    assert jnp.allclose(out_bf16, ref, atol=1e-1, rtol=1e-1), \
        float(jnp.max(jnp.abs(out_bf16 - ref)))

    print("KERNEL_OK")
</pallas_src>

<mosaic_0001>
module attributes {stable_mosaic.version = 11 : i64} {
  func.func @_variance_predictor_kernel(%arg0: i32, %arg1: memref<1x16x31xf32, #tpu.memory_space<vmem>>, %arg2: memref<1x1x16xf32, #tpu.memory_space<vmem>>, %arg3: memref<1x1xf32, #tpu.memory_space<smem>>, %arg4: memref<3x32x32xf32, #tpu.memory_space<vmem>>, %arg5: memref<1x32xf32, #tpu.memory_space<vmem>>, %arg6: memref<1x32xf32, #tpu.memory_space<vmem>>, %arg7: memref<1x32xf32, #tpu.memory_space<vmem>>, %arg8: memref<3x32x32xf32, #tpu.memory_space<vmem>>, %arg9: memref<1x32xf32, #tpu.memory_space<vmem>>, %arg10: memref<1x32xf32, #tpu.memory_space<vmem>>, %arg11: memref<1x32xf32, #tpu.memory_space<vmem>>, %arg12: memref<1x32xf32, #tpu.memory_space<vmem>>, %arg13: memref<1x1xf32, #tpu.memory_space<smem>>, %arg14: memref<1x1x16xf32, #tpu.memory_space<vmem>>, %arg15: memref<1x18x32xf32, #tpu.memory_space<vmem>>, %arg16: memref<1x18x32xf32, #tpu.memory_space<vmem>>) attributes {dimension_semantics = [#tpu.dimension_semantics<parallel>], iteration_bounds = array<i64: 2>, scalar_prefetch = 0 : i64, scratch_operands = 2 : i64, tpu.core_type = #tpu.core_type<tc>, window_params = [{transform_indices = @transform_0, window_bounds = array<i64: 1, 16, 31>}, {transform_indices = @transform_1, window_bounds = array<i64: 1, 1, 16>}, {transform_indices = @transform_2, window_bounds = array<i64: 1, 1>}, {pipeline_mode = #tpu.pipeline_mode<synchronous>, transform_indices = @transform_3, window_bounds = array<i64: 3, 32, 32>}, {pipeline_mode = #tpu.pipeline_mode<synchronous>, transform_indices = @transform_4, window_bounds = array<i64: 1, 32>}, {pipeline_mode = #tpu.pipeline_mode<synchronous>, transform_indices = @transform_5, window_bounds = array<i64: 1, 32>}, {pipeline_mode = #tpu.pipeline_mode<synchronous>, transform_indices = @transform_6, window_bounds = array<i64: 1, 32>}, {pipeline_mode = #tpu.pipeline_mode<synchronous>, transform_indices = @transform_7, window_bounds = array<i64: 3, 32, 32>}, {pipeline_mode = #tpu.pipeline_mode<synchronous>, transform_indices = @transform_8, window_bounds = array<i64: 1, 32>}, {pipeline_mode = #tpu.pipeline_mode<synchronous>, transform_indices = @transform_9, window_bounds = array<i64: 1, 32>}, {pipeline_mode = #tpu.pipeline_mode<synchronous>, transform_indices = @transform_10, window_bounds = array<i64: 1, 32>}, {pipeline_mode = #tpu.pipeline_mode<synchronous>, transform_indices = @transform_11, window_bounds = array<i64: 1, 32>}, {transform_indices = @transform_12, window_bounds = array<i64: 1, 1>}, {transform_indices = @transform_13, window_bounds = array<i64: 1, 1, 16>}]} {
    %c0_i32 = arith.constant 0 : i32
    %0 = arith.cmpi eq, %arg0, %c0_i32 : i32
    %1 = arith.extui %0 : i1 to i32
    %c0_i32_0 = arith.constant 0 : i32
    %2 = arith.cmpi ne, %1, %c0_i32_0 : i32
    scf.if %2 {
      %cst_85 = arith.constant 0.000000e+00 : f32
      %115 = vector.broadcast %cst_85 : f32 to vector<1x1x32xf32>
      %c0_86 = arith.constant 0 : index
      %c0_87 = arith.constant 0 : index
      %c0_88 = arith.constant 0 : index
      %116 = vector.load %arg15[%c0_86, %c0_87, %c0_88] : memref<1x18x32xf32, #tpu.memory_space<vmem>>, vector<1x1x32xf32>
      tpu.vector_store %arg15[%c0_86, %c0_87, %c0_88], %115 {strides = array<i32>} : memref<1x18x32xf32, #tpu.memory_space<vmem>>, vector<1x1x32xf32>,
      %cst_89 = arith.constant 0.000000e+00 : f32
      %117 = vector.broadcast %cst_89 : f32 to vector<1x1x32xf32>
      %c0_90 = arith.constant 0 : index
      %c17 = arith.constant 17 : index
      %c0_91 = arith.constant 0 : index
      %118 = vector.load %arg15[%c0_90, %c17, %c0_91] : memref<1x18x32xf32, #tpu.memory_space<vmem>>, vector<1x1x32xf32>
      tpu.vector_store %arg15[%c0_90, %c17, %c0_91], %117 {strides = array<i32>} : memref<1x18x32xf32, #tpu.memory_space<vmem>>, vector<1x1x32xf32>,
      %cst_92 = arith.constant 0.000000e+00 : f32
      %119 = vector.broadcast %cst_92 : f32 to vector<1x1x32xf32>
      %c0_93 = arith.constant 0 : index
      %c0_94 = arith.constant 0 : index
      %c0_95 = arith.constant 0 : index
      %120 = vector.load %arg16[%c0_93, %c0_94, %c0_95] : memref<1x18x32xf32, #tpu.memory_space<vmem>>, vector<1x1x32xf32>
      tpu.vector_store %arg16[%c0_93, %c0_94, %c0_95], %119 {strides = array<i32>} : memref<1x18x32xf32, #tpu.memory_space<vmem>>, vector<1x1x32xf32>,
      %cst_96 = arith.constant 0.000000e+00 : f32
      %121 = vector.broadcast %cst_96 : f32 to vector<1x1x32xf32>
      %c0_97 = arith.constant 0 : index
      %c17_98 = arith.constant 17 : index
      %c0_99 = arith.constant 0 : index
      %122 = vector.load %arg16[%c0_97, %c17_98, %c0_99] : memref<1x18x32xf32, #tpu.memory_space<vmem>>, vector<1x1x32xf32>
      tpu.vector_store %arg16[%c0_97, %c17_98, %c0_99], %121 {strides = array<i32>} : memref<1x18x32xf32, #tpu.memory_space<vmem>>, vector<1x1x32xf32>,
      %c0_100 = arith.constant 0 : index
      %c0_101 = arith.constant 0 : index
      %123 = memref.load %arg3[%c0_100, %c0_101] : memref<1x1xf32, #tpu.memory_space<smem>>
      %124 = vector.broadcast %123 : f32 to vector<1x16x1xf32>
      %c0_102 = arith.constant 0 : index
      %c1_103 = arith.constant 1 : index
      %c31 = arith.constant 31 : index
      %125 = vector.load %arg15[%c0_102, %c1_103, %c31] : memref<1x18x32xf32, #tpu.memory_space<vmem>>, vector<1x16x1xf32>
      tpu.vector_store %arg15[%c0_102, %c1_103, %c31], %124 {strides = array<i32>} : memref<1x18x32xf32, #tpu.memory_space<vmem>>, vector<1x16x1xf32>,
    } else {
    }
    %c0 = arith.constant 0 : index
    %c0_1 = arith.constant 0 : index
    %c0_2 = arith.constant 0 : index
    %3 = vector.load %arg1[%c0, %c0_1, %c0_2] : memref<1x16x31xf32, #tpu.memory_space<vmem>>, vector<1x16x31xf32>
    %c0_3 = arith.constant 0 : index
    %c1 = arith.constant 1 : index
    %c0_4 = arith.constant 0 : index
    %4 = vector.load %arg15[%c0_3, %c1, %c0_4] : memref<1x18x32xf32, #tpu.memory_space<vmem>>, vector<1x16x31xf32>
    tpu.vector_store %arg15[%c0_3, %c1, %c0_4], %3 {strides = array<i32>} : memref<1x18x32xf32, #tpu.memory_space<vmem>>, vector<1x16x31xf32>,
    %c0_5 = arith.constant 0 : index
    %c0_6 = arith.constant 0 : index
    %c0_7 = arith.constant 0 : index
    %5 = vector.load %arg15[%c0_5, %c0_6, %c0_7] : memref<1x18x32xf32, #tpu.memory_space<vmem>>, vector<1x16x32xf32>
    %6 = vector.shape_cast %5 : vector<1x16x32xf32> to vector<16x32xf32>
    %c0_8 = arith.constant 0 : index
    %c0_9 = arith.constant 0 : index
    %c0_10 = arith.constant 0 : index
    %7 = vector.load %arg4[%c0_8, %c0_9, %c0_10] : memref<3x32x32xf32, #tpu.memory_space<vmem>>, vector<1x32x32xf32>
    %8 = vector.shape_cast %7 : vector<1x32x32xf32> to vector<32x32xf32>
    %cst = arith.constant dense<0.000000e+00> : vector<16x32xf32>
    %9 = tpu.matmul %6, %8, %cst {dimension_numbers = #tpu.dot_dimension_numbers<[1], [0], [0], [1], [0, 0, 1, 1], [], []>} : vector<16x32xf32>, vector<32x32xf32>, vector<16x32xf32> -> vector<16x32xf32>
    %c0_11 = arith.constant 0 : index
    %c1_12 = arith.constant 1 : index
    %c0_13 = arith.constant 0 : index
    %10 = vector.load %arg15[%c0_11, %c1_12, %c0_13] : memref<1x18x32xf32, #tpu.memory_space<vmem>>, vector<1x16x32xf32>
    %11 = vector.shape_cast %10 : vector<1x16x32xf32> to vector<16x32xf32>
    %c1_14 = arith.constant 1 : index
    %c0_15 = arith.constant 0 : index
    %c0_16 = arith.constant 0 : index
    %12 = vector.load %arg4[%c1_14, %c0_15, %c0_16] : memref<3x32x32xf32, #tpu.memory_space<vmem>>, vector<1x32x32xf32>
    %13 = vector.shape_cast %12 : vector<1x32x32xf32> to vector<32x32xf32>
    %cst_17 = arith.constant dense<0.000000e+00> : vector<16x32xf32>
    %14 = tpu.matmul %11, %13, %cst_17 {dimension_numbers = #tpu.dot_dimension_numbers<[1], [0], [0], [1], [0, 0, 1, 1], [], []>} : vector<16x32xf32>, vector<32x32xf32>, vector<16x32xf32> -> vector<16x32xf32>
    %15 = arith.addf %9, %14 : vector<16x32xf32>
    %c0_18 = arith.constant 0 : index
    %c2 = arith.constant 2 : index
    %c0_19 = arith.constant 0 : index
    %16 = vector.load %arg15[%c0_18, %c2, %c0_19] : memref<1x18x32xf32, #tpu.memory_space<vmem>>, vector<1x16x32xf32>
    %17 = vector.shape_cast %16 : vector<1x16x32xf32> to vector<16x32xf32>
    %c2_20 = arith.constant 2 : index
    %c0_21 = arith.constant 0 : index
    %c0_22 = arith.constant 0 : index
    %18 = vector.load %arg4[%c2_20, %c0_21, %c0_22] : memref<3x32x32xf32, #tpu.memory_space<vmem>>, vector<1x32x32xf32>
    %19 = vector.shape_cast %18 : vector<1x32x32xf32> to vector<32x32xf32>
    %cst_23 = arith.constant dense<0.000000e+00> : vector<16x32xf32>
    %20 = tpu.matmul %17, %19, %cst_23 {dimension_numbers = #tpu.dot_dimension_numbers<[1], [0], [0], [1], [0, 0, 1, 1], [], []>} : vector<16x32xf32>, vector<32x32xf32>, vector<16x32xf32> -> vector<16x32xf32>
    %21 = arith.addf %15, %20 : vector<16x32xf32>
    %c0_24 = arith.constant 0 : index
    %c0_25 = arith.constant 0 : index
    %22 = vector.load %arg5[%c0_24, %c0_25] : memref<1x32xf32, #tpu.memory_space<vmem>>, vector<1x32xf32>
    %23 = vector.broadcast %22 : vector<1x32xf32> to vector<16x32xf32>
    %24 = arith.addf %21, %23 : vector<16x32xf32>
    %cst_26 = arith.constant 0.000000e+00 : f32
    %25 = vector.broadcast %cst_26 : f32 to vector<16x32xf32>
    %26 = arith.maximumf %24, %25 : vector<16x32xf32>
    %cst_27 = arith.constant dense<0.000000e+00> : vector<16xf32>
    %27 = vector.multi_reduction <add>, %26, %cst_27 [1] : vector<16x32xf32> to vector<16xf32>
    %28 = vector.shape_cast %27 : vector<16xf32> to vector<16x1xf32>
    %cst_28 = arith.constant 3.200000e+01 : f32
    %29 = vector.broadcast %cst_28 : f32 to vector<16x1xf32>
    %30 = arith.divf %28, %29 : vector<16x1xf32>
    %31 = arith.mulf %26, %26 : vector<16x32xf32>
    %cst_29 = arith.constant dense<0.000000e+00> : vector<16xf32>
    %32 = vector.multi_reduction <add>, %31, %cst_29 [1] : vector<16x32xf32> to vector<16xf32>
    %33 = vector.shape_cast %32 : vector<16xf32> to vector<16x1xf32>
    %cst_30 = arith.constant 3.200000e+01 : f32
    %34 = vector.broadcast %cst_30 : f32 to vector<16x1xf32>
    %35 = arith.divf %33, %34 : vector<16x1xf32>
    %36 = vector.broadcast %30 : vector<16x1xf32> to vector<16x32xf32>
    %37 = arith.subf %26, %36 : vector<16x32xf32>
    %38 = arith.mulf %30, %30 : vector<16x1xf32>
    %39 = arith.subf %35, %38 : vector<16x1xf32>
    %cst_31 = arith.constant 9.99999974E-6 : f32
    %40 = vector.broadcast %cst_31 : f32 to vector<16x1xf32>
    %41 = arith.addf %39, %40 : vector<16x1xf32>
    %42 = math.rsqrt %41 : vector<16x1xf32>
    %43 = vector.broadcast %42 : vector<16x1xf32> to vector<16x32xf32>
    %44 = arith.mulf %37, %43 : vector<16x32xf32>
    %c0_32 = arith.constant 0 : index
    %c0_33 = arith.constant 0 : index
    %45 = vector.load %arg6[%c0_32, %c0_33] : memref<1x32xf32, #tpu.memory_space<vmem>>, vector<1x32xf32>
    %46 = vector.broadcast %45 : vector<1x32xf32> to vector<16x32xf32>
    %47 = arith.mulf %44, %46 : vector<16x32xf32>
    %c0_34 = arith.constant 0 : index
    %c0_35 = arith.constant 0 : index
    %48 = vector.load %arg7[%c0_34, %c0_35] : memref<1x32xf32, #tpu.memory_space<vmem>>, vector<1x32xf32>
    %49 = vector.broadcast %48 : vector<1x32xf32> to vector<16x32xf32>
    %50 = arith.addf %47, %49 : vector<16x32xf32>
    %51 = vector.shape_cast %50 : vector<16x32xf32> to vector<1x16x32xf32>
    %c0_36 = arith.constant 0 : index
    %c1_37 = arith.constant 1 : index
    %c0_38 = arith.constant 0 : index
    %52 = vector.load %arg16[%c0_36, %c1_37, %c0_38] : memref<1x18x32xf32, #tpu.memory_space<vmem>>, vector<1x16x32xf32>
    tpu.vector_store %arg16[%c0_36, %c1_37, %c0_38], %51 {strides = array<i32>} : memref<1x18x32xf32, #tpu.memory_space<vmem>>, vector<1x16x32xf32>,
    %c0_39 = arith.constant 0 : index
    %c0_40 = arith.constant 0 : index
    %c0_41 = arith.constant 0 : index
    %53 = vector.load %arg16[%c0_39, %c0_40, %c0_41] : memref<1x18x32xf32, #tpu.memory_space<vmem>>, vector<1x16x32xf32>
    %54 = vector.shape_cast %53 : vector<1x16x32xf32> to vector<16x32xf32>
    %c0_42 = arith.constant 0 : index
    %c0_43 = arith.constant 0 : index
    %c0_44 = arith.constant 0 : index
    %55 = vector.load %arg8[%c0_42, %c0_43, %c0_44] : memref<3x32x32xf32, #tpu.memory_space<vmem>>, vector<1x32x32xf32>
    %56 = vector.shape_cast %55 : vector<1x32x32xf32> to vector<32x32xf32>
    %cst_45 = arith.constant dense<0.000000e+00> : vector<16x32xf32>
    %57 = tpu.matmul %54, %56, %cst_45 {dimension_numbers = #tpu.dot_dimension_numbers<[1], [0], [0], [1], [0, 0, 1, 1], [], []>} : vector<16x32xf32>, vector<32x32xf32>, vector<16x32xf32> -> vector<16x32xf32>
    %c0_46 = arith.constant 0 : index
    %c1_47 = arith.constant 1 : index
    %c0_48 = arith.constant 0 : index
    %58 = vector.load %arg16[%c0_46, %c1_47, %c0_48] : memref<1x18x32xf32, #tpu.memory_space<vmem>>, vector<1x16x32xf32>
    %59 = vector.shape_cast %58 : vector<1x16x32xf32> to vector<16x32xf32>
    %c1_49 = arith.constant 1 : index
    %c0_50 = arith.constant 0 : index
    %c0_51 = arith.constant 0 : index
    %60 = vector.load %arg8[%c1_49, %c0_50, %c0_51] : memref<3x32x32xf32, #tpu.memory_space<vmem>>, vector<1x32x32xf32>
    %61 = vector.shape_cast %60 : vector<1x32x32xf32> to vector<32x32xf32>
    %cst_52 = arith.constant dense<0.000000e+00> : vector<16x32xf32>
    %62 = tpu.matmul %59, %61, %cst_52 {dimension_numbers = #tpu.dot_dimension_numbers<[1], [0], [0], [1], [0, 0, 1, 1], [], []>} : vector<16x32xf32>, vector<32x32xf32>, vector<16x32xf32> -> vector<16x32xf32>
    %63 = arith.addf %57, %62 : vector<16x32xf32>
    %c0_53 = arith.constant 0 : index
    %c2_54 = arith.constant 2 : index
    %c0_55 = arith.constant 0 : index
    %64 = vector.load %arg16[%c0_53, %c2_54, %c0_55] : memref<1x18x32xf32, #tpu.memory_space<vmem>>, vector<1x16x32xf32>
    %65 = vector.shape_cast %64 : vector<1x16x32xf32> to vector<16x32xf32>
    %c2_56 = arith.constant 2 : index
    %c0_57 = arith.constant 0 : index
    %c0_58 = arith.constant 0 : index
    %66 = vector.load %arg8[%c2_56, %c0_57, %c0_58] : memref<3x32x32xf32, #tpu.memory_space<vmem>>, vector<1x32x32xf32>
    %67 = vector.shape_cast %66 : vector<1x32x32xf32> to vector<32x32xf32>
    %cst_59 = arith.constant dense<0.000000e+00> : vector<16x32xf32>
    %68 = tpu.matmul %65, %67, %cst_59 {dimension_numbers = #tpu.dot_dimension_numbers<[1], [0], [0], [1], [0, 0, 1, 1], [], []>} : vector<16x32xf32>, vector<32x32xf32>, vector<16x32xf32> -> vector<16x32xf32>
    %69 = arith.addf %63, %68 : vector<16x32xf32>
    %c0_60 = arith.constant 0 : index
    %c0_61 = arith.constant 0 : index
    %70 = vector.load %arg9[%c0_60, %c0_61] : memref<1x32xf32, #tpu.memory_space<vmem>>, vector<1x32xf32>
    %71 = vector.broadcast %70 : vector<1x32xf32> to vector<16x32xf32>
    %72 = arith.addf %69, %71 : vector<16x32xf32>
    %cst_62 = arith.constant 0.000000e+00 : f32
    %73 = vector.broadcast %cst_62 : f32 to vector<16x32xf32>
    %74 = arith.maximumf %72, %73 : vector<16x32xf32>
    %cst_63 = arith.constant dense<0.000000e+00> : vector<16xf32>
    %75 = vector.multi_reduction <add>, %74, %cst_63 [1] : vector<16x32xf32> to vector<16xf32>
    %76 = vector.shape_cast %75 : vector<16xf32> to vector<16x1xf32>
    %cst_64 = arith.constant 3.200000e+01 : f32
    %77 = vector.broadcast %cst_64 : f32 to vector<16x1xf32>
    %78 = arith.divf %76, %77 : vector<16x1xf32>
    %79 = arith.mulf %74, %74 : vector<16x32xf32>
    %cst_65 = arith.constant dense<0.000000e+00> : vector<16xf32>
    %80 = vector.multi_reduction <add>, %79, %cst_65 [1] : vector<16x32xf32> to vector<16xf32>
    %81 = vector.shape_cast %80 : vector<16xf32> to vector<16x1xf32>
    %cst_66 = arith.constant 3.200000e+01 : f32
    %82 = vector.broadcast %cst_66 : f32 to vector<16x1xf32>
    %83 = arith.divf %81, %82 : vector<16x1xf32>
    %84 = vector.broadcast %78 : vector<16x1xf32> to vector<16x32xf32>
    %85 = arith.subf %74, %84 : vector<16x32xf32>
    %86 = arith.mulf %78, %78 : vector<16x1xf32>
    %87 = arith.subf %83, %86 : vector<16x1xf32>
    %cst_67 = arith.constant 9.99999974E-6 : f32
    %88 = vector.broadcast %cst_67 : f32 to vector<16x1xf32>
    %89 = arith.addf %87, %88 : vector<16x1xf32>
    %90 = math.rsqrt %89 : vector<16x1xf32>
    %91 = vector.broadcast %90 : vector<16x1xf32> to vector<16x32xf32>
    %92 = arith.mulf %85, %91 : vector<16x32xf32>
    %c0_68 = arith.constant 0 : index
    %c0_69 = arith.constant 0 : index
    %93 = vector.load %arg10[%c0_68, %c0_69] : memref<1x32xf32, #tpu.memory_space<vmem>>, vector<1x32xf32>
    %94 = vector.broadcast %93 : vector<1x32xf32> to vector<16x32xf32>
    %95 = arith.mulf %92, %94 : vector<16x32xf32>
    %c0_70 = arith.constant 0 : index
    %c0_71 = arith.constant 0 : index
    %96 = vector.load %arg11[%c0_70, %c0_71] : memref<1x32xf32, #tpu.memory_space<vmem>>, vector<1x32xf32>
    %97 = vector.broadcast %96 : vector<1x32xf32> to vector<16x32xf32>
    %98 = arith.addf %95, %97 : vector<16x32xf32>
    %99 = vector.shape_cast %98 : vector<16x32xf32> to vector<1x16x32xf32>
    %c0_72 = arith.constant 0 : index
    %c0_73 = arith.constant 0 : index
    %100 = vector.load %arg12[%c0_72, %c0_73] : memref<1x32xf32, #tpu.memory_space<vmem>>, vector<1x32xf32>
    %101 = vector.shape_cast %100 : vector<1x32xf32> to vector<1x1x32xf32>
    %102 = vector.broadcast %101 : vector<1x1x32xf32> to vector<1x16x32xf32>
    %103 = arith.mulf %99, %102 : vector<1x16x32xf32>
    %cst_74 = arith.constant dense<0.000000e+00> : vector<1x16xf32>
    %104 = vector.multi_reduction <add>, %103, %cst_74 [2] : vector<1x16x32xf32> to vector<1x16xf32>
    %c0_75 = arith.constant 0 : index
    %c0_76 = arith.constant 0 : index
    %105 = memref.load %arg13[%c0_75, %c0_76] : memref<1x1xf32, #tpu.memory_space<smem>>
    %106 = vector.broadcast %105 : f32 to vector<1x16xf32>
    %107 = arith.addf %104, %106 : vector<1x16xf32>
    %c0_77 = arith.constant 0 : index
    %c0_78 = arith.constant 0 : index
    %c0_79 = arith.constant 0 : index
    %108 = vector.load %arg2[%c0_77, %c0_78, %c0_79] : memref<1x1x16xf32, #tpu.memory_space<vmem>>, vector<1x1x16xf32>
    %cst_80 = arith.constant 5.000000e-01 : f32
    %109 = vector.broadcast %cst_80 : f32 to vector<1x1x16xf32>
    %110 = arith.cmpf ogt, %108, %109 : vector<1x1x16xf32>
    %111 = vector.shape_cast %107 : vector<1x16xf32> to vector<1x1x16xf32>
    %cst_81 = arith.constant 0.000000e+00 : f32
    %112 = vector.broadcast %cst_81 : f32 to vector<1x1x16xf32>
    %113 = arith.select %110, %112, %111 : vector<1x1x16xi1>, vector<1x1x16xf32>
    %c0_82 = arith.constant 0 : index
    %c0_83 = arith.constant 0 : index
    %c0_84 = arith.constant 0 : index
    %114 = vector.load %arg14[%c0_82, %c0_83, %c0_84] : memref<1x1x16xf32, #tpu.memory_space<vmem>>, vector<1x1x16xf32>
    tpu.vector_store %arg14[%c0_82, %c0_83, %c0_84], %113 {strides = array<i32>} : memref<1x1x16xf32, #tpu.memory_space<vmem>>, vector<1x1x16xf32>,
    return
  }
  func.func @transform_0(%arg0: i32) -> (i32, i32, i32) {
    %c0_i32 = arith.constant 0 : i32
    %c0_i32_0 = arith.constant 0 : i32
    %c0_i32_1 = arith.constant 0 : i32
    return %arg0, %c0_i32, %c0_i32_0 : i32, i32, i32
  }
  func.func @transform_1(%arg0: i32) -> (i32, i32, i32) {
    %c0_i32 = arith.constant 0 : i32
    %c0_i32_0 = arith.constant 0 : i32
    %c0_i32_1 = arith.constant 0 : i32
    return %arg0, %c0_i32, %c0_i32_0 : i32, i32, i32
  }
  func.func @transform_2(%arg0: i32) -> (i32, i32) {
    %c0_i32 = arith.constant 0 : i32
    %c0_i32_0 = arith.constant 0 : i32
    %c0_i32_1 = arith.constant 0 : i32
    return %c0_i32, %c0_i32_0 : i32, i32
  }
  func.func @transform_3(%arg0: i32) -> (i32, i32, i32) {
    %c0_i32 = arith.constant 0 : i32
    %c0_i32_0 = arith.constant 0 : i32
    %c0_i32_1 = arith.constant 0 : i32
    %c0_i32_2 = arith.constant 0 : i32
    return %c0_i32, %c0_i32_0, %c0_i32_1 : i32, i32, i32
  }
  func.func @transform_4(%arg0: i32) -> (i32, i32) {
    %c0_i32 = arith.constant 0 : i32
    %c0_i32_0 = arith.constant 0 : i32
    %c0_i32_1 = arith.constant 0 : i32
    return %c0_i32, %c0_i32_0 : i32, i32
  }
  func.func @transform_5(%arg0: i32) -> (i32, i32) {
    %c0_i32 = arith.constant 0 : i32
    %c0_i32_0 = arith.constant 0 : i32
    %c0_i32_1 = arith.constant 0 : i32
    return %c0_i32, %c0_i32_0 : i32, i32
  }
  func.func @transform_6(%arg0: i32) -> (i32, i32) {
    %c0_i32 = arith.constant 0 : i32
    %c0_i32_0 = arith.constant 0 : i32
    %c0_i32_1 = arith.constant 0 : i32
    return %c0_i32, %c0_i32_0 : i32, i32
  }
  func.func @transform_7(%arg0: i32) -> (i32, i32, i32) {
    %c0_i32 = arith.constant 0 : i32
    %c0_i32_0 = arith.constant 0 : i32
    %c0_i32_1 = arith.constant 0 : i32
    %c0_i32_2 = arith.constant 0 : i32
    return %c0_i32, %c0_i32_0, %c0_i32_1 : i32, i32, i32
  }
  func.func @transform_8(%arg0: i32) -> (i32, i32) {
    %c0_i32 = arith.constant 0 : i32
    %c0_i32_0 = arith.constant 0 : i32
    %c0_i32_1 = arith.constant 0 : i32
    return %c0_i32, %c0_i32_0 : i32, i32
  }
  func.func @transform_9(%arg0: i32) -> (i32, i32) {
    %c0_i32 = arith.constant 0 : i32
    %c0_i32_0 = arith.constant 0 : i32
    %c0_i32_1 = arith.constant 0 : i32
    return %c0_i32, %c0_i32_0 : i32, i32
  }
  func.func @transform_10(%arg0: i32) -> (i32, i32) {
    %c0_i32 = arith.constant 0 : i32
    %c0_i32_0 = arith.constant 0 : i32
    %c0_i32_1 = arith.constant 0 : i32
    return %c0_i32, %c0_i32_0 : i32, i32
  }
  func.func @transform_11(%arg0: i32) -> (i32, i32) {
    %c0_i32 = arith.constant 0 : i32
    %c0_i32_0 = arith.constant 0 : i32
    %c0_i32_1 = arith.constant 0 : i32
    return %c0_i32, %c0_i32_0 : i32, i32
  }
  func.func @transform_12(%arg0: i32) -> (i32, i32) {
    %c0_i32 = arith.constant 0 : i32
    %c0_i32_0 = arith.constant 0 : i32
    %c0_i32_1 = arith.constant 0 : i32
    return %c0_i32, %c0_i32_0 : i32, i32
  }
  func.func @transform_13(%arg0: i32) -> (i32, i32, i32) {
    %c0_i32 = arith.constant 0 : i32
    %c0_i32_0 = arith.constant 0 : i32
    %c0_i32_1 = arith.constant 0 : i32
    return %arg0, %c0_i32, %c0_i32_0 : i32, i32, i32
  }
}

</mosaic_0001>

<llo_original>
// kernel: tpu_custom_call.1
$region0: #{tpu_custom_call.1}
  #allocation0 [shape = 'u32[]', space=smem, size = 0x4, offset = 0x4, fixed_abs, tag = 'smem constant byte address 0x4 - core index']
  #allocation1 [shape = 'u32[72,128]{1,0:T(1,128)}', space=vmem, size = 0x9000, scoped, tag = 'internal scratch']
  #allocation2 [shape = 'f32[1,18,32]{2,1,0:T(8,128)}', space=vmem, size = 0x3000, scoped, tag = 'scratch operand']
  #allocation3 [shape = 'f32[1,18,32]{2,1,0:T(8,128)}', space=vmem, size = 0x3000, scoped, tag = 'scratch operand']
  #allocation4 [shape = 'f32[1,1]{1,0:T(1,128)S(6)}', space=smem, size = 0x200, scoped, tag = 'scoped memory for tpu_custom_call.1']
  #allocation5 [shape = 'f32[1,1]{1,0:T(1,128)S(6)}', space=smem, size = 0x200, scoped, tag = 'scoped memory for tpu_custom_call.1']
  %s0 = inlined_call_operand.hbm [shape: f32[2,16,31], index: 0, kind: input, shape index: {}]
  %s1 = inlined_call_operand.vmem [shape: f32[2,1,16], index: 1, kind: input, shape index: {}]
  %s2 = inlined_call_operand.<no memory space> [shape: f32[1,1], index: 2, kind: input, shape index: {}]
  %s3 = inlined_call_operand.hbm [shape: f32[3,32,32], index: 3, kind: input, shape index: {}]
  %s4 = inlined_call_operand.vmem [shape: f32[1,32], index: 4, kind: input, shape index: {}]
  %s5 = inlined_call_operand.vmem [shape: f32[1,32], index: 5, kind: input, shape index: {}]
  %s6 = inlined_call_operand.vmem [shape: f32[1,32], index: 6, kind: input, shape index: {}]
  %s7 = inlined_call_operand.hbm [shape: f32[3,32,32], index: 7, kind: input, shape index: {}]
  %s8 = inlined_call_operand.vmem [shape: f32[1,32], index: 8, kind: input, shape index: {}]
  %s9 = inlined_call_operand.vmem [shape: f32[1,32], index: 9, kind: input, shape index: {}]
  %s10 = inlined_call_operand.vmem [shape: f32[1,32], index: 10, kind: input, shape index: {}]
  %s11 = inlined_call_operand.vmem [shape: f32[1,32], index: 11, kind: input, shape index: {}]
  %s12 = inlined_call_operand.<no memory space> [shape: f32[1,1], index: 12, kind: input, shape index: {}]
  %s13 = inlined_call_operand.hbm [shape: f32[2,1,16], index: 13, kind: output, shape index: {}]
  %s14 = sld [smem:[#allocation0]]
  $region101: #{tpu_custom_call.1} parent=0
    _
  %s16 = ssub.s32 1, %s14
  %s17 = scalar_select 0, %s16, %s14
  %18 = sst [smem:[#allocation4]] %s2
  %19 = sst [smem:[#allocation5]] %s12
  $region1: #{tpu_custom_call.1} parent=0
    #allocation6 [shape = 'u8[16384]{0}', space=vmem, size = 0x4000, scoped, tag = 'input window, operand 0']
    #allocation7 [shape = 's32[2]{0}', space=sflag, size = 0x8, scoped, tag = 'scoped memory for tpu_custom_call.1']
    #allocation8 [shape = 's32[2]{0}', space=sflag, size = 0x8, scoped, tag = 'scoped memory for tpu_custom_call.1']
    #allocation9 [shape = 'u8[49152]{0}', space=vmem, size = 0xc000, scoped, tag = 'input window, operand 3, single buffered']
    #allocation10 [shape = 's32[1]{0}', space=sflag, size = 0x4, scoped, tag = 'scoped memory for tpu_custom_call.1']
    #allocation11 [shape = 'u8[49152]{0}', space=vmem, size = 0xc000, scoped, tag = 'input window, operand 7, single buffered']
    #allocation12 [shape = 'u8[1024]{0}', space=vmem, size = 0x400, scoped, tag = 'output window, operand 0']
    %20 = vsyncpa [#allocation7], 0
    %s21 = scalar_lea.sflag [#allocation7], 1
    %22 = vsyncpa %s21, 0
    %23 = vsyncpa [#allocation10], 0
    %24 = vsyncpa [#allocation8], 0
    %s25 = scalar_lea.sflag [#allocation8], 1
    %26 = vsyncpa %s25, 0
    loop: start=0, step=1, limit=4
    $region2: #{tpu_custom_call.1} parent=1 // loop_pre_header
      _
    $region3: #{tpu_custom_call.1} parent=1 // loop_header
      %s28 = sphi 0, %s32
      %p29 = scmp.ge.s32.totalorder %s28, 4
      %s38 = sphi 0, %s40
      %s41 = sphi 0, %s38
      %s42 = sphi 0, %s41
      %s58 = sphi 0, %s42
      %s64 = sphi 0, %s66
      %s67 = sphi 0, %s64
      %s68 = sphi 0, %s67
      %s84 = sphi 0, %s68
      %s88 = sphi 0, %s88
      %s90 = sphi 0, %s88
      %s91 = sphi 0, %s90
      %s105 = sphi 0, %s91
      %s109 = sphi 0, %s109
      %s111 = sphi 0, %s109
      %s112 = sphi 0, %s111
      %s126 = sphi 0, %s112
      %s130 = sphi 0, %s130
      %s132 = sphi 0, %s130
      %s133 = sphi 0, %s132
      %s147 = sphi 0, %s133
      %s151 = sphi 0, %s151
      %s153 = sphi 0, %s151
      %s154 = sphi 0, %s153
      %s168 = sphi 0, %s154
      %s172 = sphi 0, %s172
      %s174 = sphi 0, %s172
      %s175 = sphi 0, %s174
      %s189 = sphi 0, %s175
      %s193 = sphi 0, %s193
      %s195 = sphi 0, %s193
      %s196 = sphi 0, %s195
      %s210 = sphi 0, %s196
      %s214 = sphi 0, %s214
      %s216 = sphi 0, %s214
      %s217 = sphi 0, %s216
      %s231 = sphi 0, %s217
      %s235 = sphi 0, %s235
      %s237 = sphi 0, %s235
      %s238 = sphi 0, %s237
      %s252 = sphi 0, %s238
      %s256 = sphi 0, %s256
      %s258 = sphi 0, %s256
      %s259 = sphi 0, %s258
      %s273 = sphi 0, %s259
      %s277 = sphi 0, %s277
      %s279 = sphi 0, %s277
      %s280 = sphi 0, %s279
      %s294 = sphi 0, %s280
      %s298 = sphi 0, %s298
      %s300 = sphi 0, %s298
      %s301 = sphi 0, %s300
      %s315 = sphi 0, %s301
      %s321 = sphi 0, %s323
      %s324 = sphi 0, %s321
      %s325 = sphi 0, %s324
      %s341 = sphi 0, %s325
    $region4: #{tpu_custom_call.1} parent=1 // loop_header_branch
      %31 = sbr.rel (%p29) target = $region8
    $region5: #{tpu_custom_call.1} parent=1 // loop_body
      %s33 = ssub.s32 %s28, 1
      %s34 = ssub.s32 %s28, 2
      %s35 = sadd.s32 %s28, 1
      %s36 = ssub.s32 %s28, %s35
      %p37 = scmp.eq.s32.totalorder %s36, 0
      %s39 = sadd.s32 %s38, 1
      %s40 = scalar_select %p37, %s38, %s39
      %p43 = pneg %p37
      %p44 = scmp.eq.s32.totalorder %s28, 1
      %p45 = por %p43, %p44
      %p46 = scmp.ne.s32.totalorder %s38, %s41
      %p47 = scmp.eq.s32.totalorder %s28, 0
      %p48 = por %p46, %p47
      %p49 = scmp.ne.s32.totalorder %s38, %s41
      %p50 = scmp.eq.s32.totalorder %s33, 1
      %p51 = por %p49, %p50
      %p52 = scmp.ne.s32.totalorder %s41, %s42
      %p53 = scmp.eq.s32.totalorder %s33, 0
      %p54 = por %p52, %p53
      %p55 = scmp.ne.s32.totalorder %s41, %s42
      %p56 = scmp.eq.s32.totalorder %s34, 1
      %p57 = por %p55, %p56
      %p59 = scmp.ne.s32.totalorder %s42, %s58
      %p60 = scmp.eq.s32.totalorder %s34, 0
      %p61 = por %p59, %p60
      %s62 = ssub.s32 %s28, %s35
      %p63 = scmp.eq.s32.totalorder %s62, 0
      %s65 = sadd.s32 %s64, 1
      %s66 = scalar_select %p63, %s64, %s65
      %p69 = pneg %p63
      %p70 = scmp.eq.s32.totalorder %s28, 1
      %p71 = por %p69, %p70
      %p72 = scmp.ne.s32.totalorder %s64, %s67
      %p73 = scmp.eq.s32.totalorder %s28, 0
      %p74 = por %p72, %p73
      %p75 = scmp.ne.s32.totalorder %s64, %s67
      %p76 = scmp.eq.s32.totalorder %s33, 1
      %p77 = por %p75, %p76
      %p78 = scmp.ne.s32.totalorder %s67, %s68
      %p79 = scmp.eq.s32.totalorder %s33, 0
      %p80 = por %p78, %p79
      %p81 = scmp.ne.s32.totalorder %s67, %s68
      %p82 = scmp.eq.s32.totalorder %s34, 1
      %p83 = por %p81, %p82
      %p85 = scmp.ne.s32.totalorder %s68, %s84
      %p86 = scmp.eq.s32.totalorder %s34, 0
      %p87 = por %p85, %p86
      %s89 = sadd.s32 %s88, 1
      %p92 = scmp.eq.s32.totalorder %s28, 1
      %p93 = scmp.ne.s32.totalorder %s88, %s90
      %p94 = scmp.eq.s32.totalorder %s28, 0
      %p95 = por %p93, %p94
      %p96 = scmp.ne.s32.totalorder %s88, %s90
      %p97 = scmp.eq.s32.totalorder %s33, 1
      %p98 = por %p96, %p97
      %p99 = scmp.ne.s32.totalorder %s90, %s91
      %p100 = scmp.eq.s32.totalorder %s33, 0
      %p101 = por %p99, %p100
      %p102 = scmp.ne.s32.totalorder %s90, %s91
      %p103 = scmp.eq.s32.totalorder %s34, 1
      %p104 = por %p102, %p103
      %p106 = scmp.ne.s32.totalorder %s91, %s105
      %p107 = scmp.eq.s32.totalorder %s34, 0
      %p108 = por %p106, %p107
      %s110 = sadd.s32 %s109, 1
      %p113 = scmp.eq.s32.totalorder %s28, 1
      %p114 = scmp.ne.s32.totalorder %s109, %s111
      %p115 = scmp.eq.s32.totalorder %s28, 0
      %p116 = por %p114, %p115
      %p117 = scmp.ne.s32.totalorder %s109, %s111
      %p118 = scmp.eq.s32.totalorder %s33, 1
      %p119 = por %p117, %p118
      %p120 = scmp.ne.s32.totalorder %s111, %s112
      %p121 = scmp.eq.s32.totalorder %s33, 0
      %p122 = por %p120, %p121
      %p123 = scmp.ne.s32.totalorder %s111, %s112
      %p124 = scmp.eq.s32.totalorder %s34, 1
      %p125 = por %p123, %p124
      %p127 = scmp.ne.s32.totalorder %s112, %s126
      %p128 = scmp.eq.s32.totalorder %s34, 0
      %p129 = por %p127, %p128
      %s131 = sadd.s32 %s130, 1
      %p134 = scmp.eq.s32.totalorder %s28, 1
      %p135 = scmp.ne.s32.totalorder %s130, %s132
      %p136 = scmp.eq.s32.totalorder %s28, 0
      %p137 = por %p135, %p136
      %p138 = scmp.ne.s32.totalorder %s130, %s132
      %p139 = scmp.eq.s32.totalorder %s33, 1
      %p140 = por %p138, %p139
      %p141 = scmp.ne.s32.totalorder %s132, %s133
      %p142 = scmp.eq.s32.totalorder %s33, 0
      %p143 = por %p141, %p142
      %p144 = scmp.ne.s32.totalorder %s132, %s133
      %p145 = scmp.eq.s32.totalorder %s34, 1
      %p146 = por %p144, %p145
      %p148 = scmp.ne.s32.totalorder %s133, %s147
      %p149 = scmp.eq.s32.totalorder %s34, 0
      %p150 = por %p148, %p149
      %s152 = sadd.s32 %s151, 1
      %p155 = scmp.eq.s32.totalorder %s28, 1
      %p156 = scmp.ne.s32.totalorder %s151, %s153
      %p157 = scmp.eq.s32.totalorder %s28, 0
      %p158 = por %p156, %p157
      %p159 = scmp.ne.s32.totalorder %s151, %s153
      %p160 = scmp.eq.s32.totalorder %s33, 1
      %p161 = por %p159, %p160
      %p162 = scmp.ne.s32.totalorder %s153, %s154
      %p163 = scmp.eq.s32.totalorder %s33, 0
      %p164 = por %p162, %p163
      %p165 = scmp.ne.s32.totalorder %s153, %s154
      %p166 = scmp.eq.s32.totalorder %s34, 1
      %p167 = por %p165, %p166
      %p169 = scmp.ne.s32.totalorder %s154, %s168
      %p170 = scmp.eq.s32.totalorder %s34, 0
      %p171 = por %p169, %p170
      %s173 = sadd.s32 %s172, 1
      %p176 = scmp.eq.s32.totalorder %s28, 1
      %p177 = scmp.ne.s32.totalorder %s172, %s174
      %p178 = scmp.eq.s32.totalorder %s28, 0
      %p179 = por %p177, %p178
      %p180 = scmp.ne.s32.totalorder %s172, %s174
      %p181 = scmp.eq.s32.totalorder %s33, 1
      %p182 = por %p180, %p181
      %p183 = scmp.ne.s32.totalorder %s174, %s175
      %p184 = scmp.eq.s32.totalorder %s33, 0
      %p185 = por %p183, %p184
      %p186 = scmp.ne.s32.totalorder %s174, %s175
      %p187 = scmp.eq.s32.totalorder %s34, 1
      %p188 = por %p186, %p187
      %p190 = scmp.ne.s32.totalorder %s175, %s189
      %p191 = scmp.eq.s32.totalorder %s34, 0
      %p192 = por %p190, %p191
      %s194 = sadd.s32 %s193, 1
      %p197 = scmp.eq.s32.totalorder %s28, 1
      %p198 = scmp.ne.s32.totalorder %s193, %s195
      %p199 = scmp.eq.s32.totalorder %s28, 0
      %p200 = por %p198, %p199
      %p201 = scmp.ne.s32.totalorder %s193, %s195
      %p202 = scmp.eq.s32.totalorder %s33, 1
      %p203 = por %p201, %p202
      %p204 = scmp.ne.s32.totalorder %s195, %s196
      %p205 = scmp.eq.s32.totalorder %s33, 0
      %p206 = por %p204, %p205
      %p207 = scmp.ne.s32.totalorder %s195, %s196
      %p208 = scmp.eq.s32.totalorder %s34, 1
      %p209 = por %p207, %p208
      %p211 = scmp.ne.s32.totalorder %s196, %s210
      %p212 = scmp.eq.s32.totalorder %s34, 0
      %p213 = por %p211, %p212
      %s215 = sadd.s32 %s214, 1
      %p218 = scmp.eq.s32.totalorder %s28, 1
      %p219 = scmp.ne.s32.totalorder %s214, %s216
      %p220 = scmp.eq.s32.totalorder %s28, 0
      %p221 = por %p219, %p220
      %p222 = scmp.ne.s32.totalorder %s214, %s216
      %p223 = scmp.eq.s32.totalorder %s33, 1
      %p224 = por %p222, %p223
      %p225 = scmp.ne.s32.totalorder %s216, %s217
      %p226 = scmp.eq.s32.totalorder %s33, 0
      %p227 = por %p225, %p226
      %p228 = scmp.ne.s32.totalorder %s216, %s217
      %p229 = scmp.eq.s32.totalorder %s34, 1
      %p230 = por %p228, %p229
      %p232 = scmp.ne.s32.totalorder %s217, %s231
      %p233 = scmp.eq.s32.totalorder %s34, 0
      %p234 = por %p232, %p233
      %s236 = sadd.s32 %s235, 1
      %p239 = scmp.eq.s32.totalorder %s28, 1
      %p240 = scmp.ne.s32.totalorder %s235, %s237
      %p241 = scmp.eq.s32.totalorder %s28, 0
      %p242 = por %p240, %p241
      %p243 = scmp.ne.s32.totalorder %s235, %s237
      %p244 = scmp.eq.s32.totalorder %s33, 1
      %p245 = por %p243, %p244
      %p246 = scmp.ne.s32.totalorder %s237, %s238
      %p247 = scmp.eq.s32.totalorder %s33, 0
      %p248 = por %p246, %p247
      %p249 = scmp.ne.s32.totalorder %s237, %s238
      %p250 = scmp.eq.s32.totalorder %s34, 1
      %p251 = por %p249, %p250
      %p253 = scmp.ne.s32.totalorder %s238, %s252
      %p254 = scmp.eq.s32.totalorder %s34, 0
      %p255 = por %p253, %p254
      %s257 = sadd.s32 %s256, 1
      %p260 = scmp.eq.s32.totalorder %s28, 1
      %p261 = scmp.ne.s32.totalorder %s256, %s258
      %p262 = scmp.eq.s32.totalorder %s28, 0
      %p263 = por %p261, %p262
      %p264 = scmp.ne.s32.totalorder %s256, %s258
      %p265 = scmp.eq.s32.totalorder %s33, 1
      %p266 = por %p264, %p265
      %p267 = scmp.ne.s32.totalorder %s258, %s259
      %p268 = scmp.eq.s32.totalorder %s33, 0
      %p269 = por %p267, %p268
      %p270 = scmp.ne.s32.totalorder %s258, %s259
      %p271 = scmp.eq.s32.totalorder %s34, 1
      %p272 = por %p270, %p271
      %p274 = scmp.ne.s32.totalorder %s259, %s273
      %p275 = scmp.eq.s32.totalorder %s34, 0
      %p276 = por %p274, %p275
      %s278 = sadd.s32 %s277, 1
      %p281 = scmp.eq.s32.totalorder %s28, 1
      %p282 = scmp.ne.s32.totalorder %s277, %s279
      %p283 = scmp.eq.s32.totalorder %s28, 0
      %p284 = por %p282, %p283
      %p285 = scmp.ne.s32.totalorder %s277, %s279
      %p286 = scmp.eq.s32.totalorder %s33, 1
      %p287 = por %p285, %p286
      %p288 = scmp.ne.s32.totalorder %s279, %s280
      %p289 = scmp.eq.s32.totalorder %s33, 0
      %p290 = por %p288, %p289
      %p291 = scmp.ne.s32.totalorder %s279, %s280
      %p292 = scmp.eq.s32.totalorder %s34, 1
      %p293 = por %p291, %p292
      %p295 = scmp.ne.s32.totalorder %s280, %s294
      %p296 = scmp.eq.s32.totalorder %s34, 0
      %p297 = por %p295, %p296
      %s299 = sadd.s32 %s298, 1
      %p302 = scmp.eq.s32.totalorder %s28, 1
      %p303 = scmp.ne.s32.totalorder %s298, %s300
      %p304 = scmp.eq.s32.totalorder %s28, 0
      %p305 = por %p303, %p304
      %p306 = scmp.ne.s32.totalorder %s298, %s300
      %p307 = scmp.eq.s32.totalorder %s33, 1
      %p308 = por %p306, %p307
      %p309 = scmp.ne.s32.totalorder %s300, %s301
      %p310 = scmp.eq.s32.totalorder %s33, 0
      %p311 = por %p309, %p310
      %p312 = scmp.ne.s32.totalorder %s300, %s301
      %p313 = scmp.eq.s32.totalorder %s34, 1
      %p314 = por %p312, %p313
      %p316 = scmp.ne.s32.totalorder %s301, %s315
      %p317 = scmp.eq.s32.totalorder %s34, 0
      %p318 = por %p316, %p317
      %s319 = ssub.s32 %s28, %s35
      %p320 = scmp.eq.s32.totalorder %s319, 0
      %s322 = sadd.s32 %s321, 1
      %s323 = scalar_select %p320, %s321, %s322
      %p326 = pneg %p320
      %p327 = scmp.eq.s32.totalorder %s28, 1
      %p328 = por %p326, %p327
      %p329 = scmp.ne.s32.totalorder %s321, %s324
      %p330 = scmp.eq.s32.totalorder %s28, 0
      %p331 = por %p329, %p330
      %p332 = scmp.ne.s32.totalorder %s321, %s324
      %p333 = scmp.eq.s32.totalorder %s33, 1
      %p334 = por %p332, %p333
      %p335 = scmp.ne.s32.totalorder %s324, %s325
      %p336 = scmp.eq.s32.totalorder %s33, 0
      %p337 = por %p335, %p336
      %p338 = scmp.ne.s32.totalorder %s324, %s325
      %p339 = scmp.eq.s32.totalorder %s34, 1
      %p340 = por %p338, %p339
      %p342 = scmp.ne.s32.totalorder %s325, %s341
      %p343 = scmp.eq.s32.totalorder %s34, 0
      %p344 = por %p342, %p343
      %p345 = scmp.le.s32.totalorder 1, %s28
      %p346 = scmp.lt.s32.totalorder %s28, 3
      %p347 = pnand %p345, %p346
      %p348 = pneg %p347
      // Predicated region
      $region9: #{tpu_custom_call.1} parent=5 // pred_check
        _
      $region10: #{tpu_custom_call.1} parent=5 // pred_check_branch
        %350 = sbr.rel (%p347) target = $region12
      $region11: #{tpu_custom_call.1} parent=5 // pred_region
        %s351 = ssub.s32 %s28, 1
        // Predicated region
        $region13: #{tpu_custom_call.1} parent=11 // pred_check
          %p352 = pneg %p101
        $region14: #{tpu_custom_call.1} parent=11 // pred_check_branch
          %354 = sbr.rel (%p352) target = $region16
        $region15: #{tpu_custom_call.1} parent=11 // pred_region
          _
        $region16: #{tpu_custom_call.1} parent=11 // pred_fallthru
          _
        // Predicated region
        $region17: #{tpu_custom_call.1} parent=11 // pred_check
          %p355 = pneg %p122
        $region18: #{tpu_custom_call.1} parent=11 // pred_check_branch
          %357 = sbr.rel (%p355) target = $region20
        $region19: #{tpu_custom_call.1} parent=11 // pred_region
          %359 = vsyncadd [#allocation10], 0
          %s360 = sshll.u32 %s3, 4
          %s361 = int_to_ptr.hbm [resolvable:$true] %s360
          %s362 = sshll.u32 [#allocation9], 4
          %s363 = int_to_ptr.vmem [resolvable:$true] %s362
          %368 = dma.hbm_to_vmem [thread:$0]  %s361, 1536, %s363, [#allocation10], 128, 128, 8
        $region20: #{tpu_custom_call.1} parent=11 // pred_fallthru
          _
        // Predicated region
        $region21: #{tpu_custom_call.1} parent=11 // pred_check
          %p369 = pneg %p143
        $region22: #{tpu_custom_call.1} parent=11 // pred_check_branch
          %371 = sbr.rel (%p369) target = $region24
        $region23: #{tpu_custom_call.1} parent=11 // pred_region
          _
        $region24: #{tpu_custom_call.1} parent=11 // pred_fallthru
          _
        // Predicated region
        $region25: #{tpu_custom_call.1} parent=11 // pred_check
          %p372 = pneg %p164
        $region26: #{tpu_custom_call.1} parent=11 // pred_check_branch
          %374 = sbr.rel (%p372) target = $region28
        $region27: #{tpu_custom_call.1} parent=11 // pred_region
          _
        $region28: #{tpu_custom_call.1} parent=11 // pred_fallthru
          _
        // Predicated region
        $region29: #{tpu_custom_call.1} parent=11 // pred_check
          %p375 = pneg %p185
        $region30: #{tpu_custom_call.1} parent=11 // pred_check_branch
          %377 = sbr.rel (%p375) target = $region32
        $region31: #{tpu_custom_call.1} parent=11 // pred_region
          _
        $region32: #{tpu_custom_call.1} parent=11 // pred_fallthru
          _
        // Predicated region
        $region33: #{tpu_custom_call.1} parent=11 // pred_check
          %p378 = pneg %p206
        $region34: #{tpu_custom_call.1} parent=11 // pred_check_branch
          %380 = sbr.rel (%p378) target = $region36
        $region35: #{tpu_custom_call.1} parent=11 // pred_region
          %382 = vsyncadd [#allocation10], 0
          %s383 = sshll.u32 %s7, 4
          %s384 = int_to_ptr.hbm [resolvable:$true] %s383
          %s385 = sshll.u32 [#allocation11], 4
          %s386 = int_to_ptr.vmem [resolvable:$true] %s385
          %391 = dma.hbm_to_vmem [thread:$0]  %s384, 1536, %s386, [#allocation10], 128, 128, 8
        $region36: #{tpu_custom_call.1} parent=11 // pred_fallthru
          _
        // Predicated region
        $region37: #{tpu_custom_call.1} parent=11 // pred_check
          %p392 = pneg %p227
        $region38: #{tpu_custom_call.1} parent=11 // pred_check_branch
          %394 = sbr.rel (%p392) target = $region40
        $region39: #{tpu_custom_call.1} parent=11 // pred_region
          _
        $region40: #{tpu_custom_call.1} parent=11 // pred_fallthru
          _
        // Predicated region
        $region41: #{tpu_custom_call.1} parent=11 // pred_check
          %p395 = pneg %p248
        $region42: #{tpu_custom_call.1} parent=11 // pred_check_branch
          %397 = sbr.rel (%p395) target = $region44
        $region43: #{tpu_custom_call.1} parent=11 // pred_region
          _
        $region44: #{tpu_custom_call.1} parent=11 // pred_fallthru
          _
        // Predicated region
        $region45: #{tpu_custom_call.1} parent=11 // pred_check
          %p398 = pneg %p269
        $region46: #{tpu_custom_call.1} parent=11 // pred_check_branch
          %400 = sbr.rel (%p398) target = $region48
        $region47: #{tpu_custom_call.1} parent=11 // pred_region
          _
        $region48: #{tpu_custom_call.1} parent=11 // pred_fallthru
          _
        // Predicated region
        $region49: #{tpu_custom_call.1} parent=11 // pred_check
          %p401 = pneg %p290
        $region50: #{tpu_custom_call.1} parent=11 // pred_check_branch
          %403 = sbr.rel (%p401) target = $region52
        $region51: #{tpu_custom_call.1} parent=11 // pred_region
          _
        $region52: #{tpu_custom_call.1} parent=11 // pred_fallthru
          _
        // Predicated region
        $region53: #{tpu_custom_call.1} parent=11 // pred_check
          %p404 = pneg %p311
        $region54: #{tpu_custom_call.1} parent=11 // pred_check_branch
          %406 = sbr.rel (%p404) target = $region56
        $region55: #{tpu_custom_call.1} parent=11 // pred_region
          _
        $region56: #{tpu_custom_call.1} parent=11 // pred_fallthru
          _
      $region12: #{tpu_custom_call.1} parent=5 // pred_fallthru
        _
      %p407 = scmp.lt.s32.totalorder %s28, 2
      // Predicated region
      $region57: #{tpu_custom_call.1} parent=5 // pred_check
        %p408 = pneg %p407
      $region58: #{tpu_custom_call.1} parent=5 // pred_check_branch
        %410 = sbr.rel (%p408) target = $region60
      $region59: #{tpu_custom_call.1} parent=5 // pred_region
        // Predicated region
        $region61: #{tpu_custom_call.1} parent=59 // pred_check
          %p411 = pneg %p48
        $region62: #{tpu_custom_call.1} parent=59 // pred_check_branch
          %413 = sbr.rel (%p411) target = $region64
        $region63: #{tpu_custom_call.1} parent=59 // pred_region
          %s414 = sand.u32 %s38, 1
          %s415 = scalar_lea.sflag [#allocation7], %s414
          %s416 = sand.u32 %s38, 1
          %s417 = smul.addr %s416, 16
          %s418 = scalar_lea.vmem [#allocation6], %s417
          %420 = vsyncadd %s415, 0
          %s421 = smul.addr %s28, 2
          %s422 = smul.addr %s421, 8
          %s423 = scalar_lea.hbm %s0, %s422
          %s424 = sshll.u32 %s423, 4
          %s425 = int_to_ptr.hbm [resolvable:$true] %s424
          %s426 = sshll.u32 %s418, 4
          %s427 = int_to_ptr.vmem [resolvable:$true] %s426
          %432 = dma.hbm_to_vmem [thread:$0]  %s425, 256, %s427, %s415, 128, 128, 8
        $region64: #{tpu_custom_call.1} parent=59 // pred_fallthru
          _
        // Predicated region
        $region65: #{tpu_custom_call.1} parent=59 // pred_check
          %p433 = pneg %p74
        $region66: #{tpu_custom_call.1} parent=59 // pred_check_branch
          %435 = sbr.rel (%p433) target = $region68
        $region67: #{tpu_custom_call.1} parent=59 // pred_region
          %p436 = scmp.lt.s32.totalorder %s28, 1
          %s437 = scalar_select %p436, %s28, 1
          %s438 = scalar_lea.vmem %s1, %s437
        $region68: #{tpu_custom_call.1} parent=59 // pred_fallthru
          _
      $region60: #{tpu_custom_call.1} parent=5 // pred_fallthru
        _
      %p439 = scmp.le.s32.totalorder 1, %s28
      %p440 = scmp.lt.s32.totalorder %s28, 3
      %p441 = pnand %p439, %p440
      %p442 = pneg %p441
      // Predicated region
      $region69: #{tpu_custom_call.1} parent=5 // pred_check
        _
      $region70: #{tpu_custom_call.1} parent=5 // pred_check_branch
        %444 = sbr.rel (%p441) target = $region72
      $region71: #{tpu_custom_call.1} parent=5 // pred_region
        %s445 = ssub.s32 %s28, 1
        %s446 = sand.u32 %s41, 1
        %s447 = scalar_lea.sflag [#allocation7], %s446
        %s448 = sand.u32 %s41, 1
        %s449 = smul.addr %s448, 16
        %s450 = scalar_lea.vmem [#allocation6], %s449
        // Predicated region
        $region73: #{tpu_custom_call.1} parent=71 // pred_check
          %p451 = pneg %p54
        $region74: #{tpu_custom_call.1} parent=71 // pred_check_branch
          %453 = sbr.rel (%p451) target = $region76
        $region75: #{tpu_custom_call.1} parent=71 // pred_region
          %455 = dma.done %s447, 256
        $region76: #{tpu_custom_call.1} parent=71 // pred_fallthru
          _
        // Predicated region
        $region77: #{tpu_custom_call.1} parent=71 // pred_check
          %p456 = pneg %p122
        $region78: #{tpu_custom_call.1} parent=71 // pred_check_branch
          %458 = sbr.rel (%p456) target = $region80
        $region79: #{tpu_custom_call.1} parent=71 // pred_region
          %460 = dma.done [#allocation10], 1536
        $region80: #{tpu_custom_call.1} parent=71 // pred_fallthru
          _
        // Predicated region
        $region81: #{tpu_custom_call.1} parent=71 // pred_check
          %p461 = pneg %p206
        $region82: #{tpu_custom_call.1} parent=71 // pred_check_branch
          %463 = sbr.rel (%p461) target = $region84
        $region83: #{tpu_custom_call.1} parent=71 // pred_region
          %465 = dma.done [#allocation10], 1536
        $region84: #{tpu_custom_call.1} parent=71 // pred_fallthru
          _
        %s466 = sand.u32 %s41, 1
        %s467 = scalar_lea.sflag [#allocation7], %s466
        %s468 = sand.u32 %s41, 1
        %s469 = smul.addr %s468, 16
        %s470 = scalar_lea.vmem [#allocation6], %s469
        %p471 = pneg %p54
        %p472 = pneg %p51
        %p473 = scmp.lt.s32.totalorder %s33, 1
        %s474 = scalar_select %p473, %s33, 1
        %s475 = scalar_lea.vmem %s1, %s474
        %p476 = pneg %p80
        %p477 = pneg %p77
        %p478 = pneg %p101
        %p479 = pneg %p98
        %p480 = pneg %p122
        %p481 = pneg %p119
        %p482 = pneg %p143
        %p483 = pneg %p140
        %p484 = pneg %p164
        %p485 = pneg %p161
        %p486 = pneg %p185
        %p487 = pneg %p182
        %p488 = pneg %p206
        %p489 = pneg %p203
        %p490 = pneg %p227
        %p491 = pneg %p224
        %p492 = pneg %p248
        %p493 = pneg %p245
        %p494 = pneg %p269
        %p495 = pneg %p266
        %p496 = pneg %p290
        %p497 = pneg %p287
        %p498 = pneg %p311
        %p499 = pneg %p308
        %p500 = pneg %p337
        %p501 = pneg %p334
        %s502 = sand.u32 %s324, 1
        %s503 = scalar_lea.sflag [#allocation8], %s502
        %s504 = sand.u32 %s324, 1
        %s505 = scalar_lea.vmem [#allocation12], %s504
        %p506 = scmp.lt.s32.totalorder %s33, 1
        %s507 = scalar_select %p506, %s33, 1
        %s508 = scalar_lea.vmem %s1, %s507
        %p509 = scmp.eq.s32.totalorder %s33, 0
        // Predicated region
        $region85: #{tpu_custom_call.1} parent=71 // pred_check
          %p510 = pneg %p509
        $region86: #{tpu_custom_call.1} parent=71 // pred_check_branch
          %512 = sbr.rel (%p510) target = $region88
        $region87: #{tpu_custom_call.1} parent=71 // pred_region
          %vm513 = vcmask 253952
          %514 = vst.msk [vmem:[#allocation2] sm:$0x1] %vm513, 0.0
          %515 = vst.msk [vmem:[#allocation2 + $0x11] sm:$0x1] %vm513, 0.0
          %516 = vst.msk [vmem:[#allocation3] sm:$0x1] %vm513, 0.0
          %517 = vst.msk [vmem:[#allocation3 + $0x11] sm:$0x1] %vm513, 0.0
          %s518 = sld [smem:[#allocation4]]
          %v519 = vstv %s518
          %vm520 = vcmask 261368
          %521 = vst.msk [vmem:[#allocation2 + $0x1] sm:$0xff] %vm520, %v519
          %522 = vst.msk [vmem:[#allocation2 + $0x9] sm:$0xff] %vm520, %v519
        $region88: #{tpu_custom_call.1} parent=71 // pred_fallthru
          _
        %v523 = vld [vmem:[%s450] sm:$0xff]
        %v524 = vld [vmem:[%s450 + $0x8] sm:$0xff]
        %vm525 = vcmask 252928
        %526 = vst.msk [vmem:[#allocation2 + $0x1] sm:$0xff] %vm525, %v523
        %527 = vst.msk [vmem:[#allocation2 + $0x9] sm:$0xff] %vm525, %v524
        %v528 = vld [vmem:[#allocation2] sm:$0xff]
        %v529 = vld [vmem:[#allocation2 + $0x8] sm:$0xff]
        %v530 = vld [vmem:[#allocation9] sm:$0xff]
        %v531 = vld [vmem:[#allocation9 + $0x8] sm:$0xff]
        %v532 = vld [vmem:[#allocation9 + $0x10] sm:$0xff]
        %v533 = vld [vmem:[#allocation9 + $0x18] sm:$0xff]
        %v534 = vld [vmem:[#allocation2 + $0x1] sm:$0xff]
        %v535 = vld [vmem:[#allocation2 + $0x9] sm:$0xff]
        %s536 = scalar_lea.vmem [#allocation9], 32
        %v537 = vld [vmem:[%s536] sm:$0xff]
        %v538 = vld [vmem:[%s536 + $0x8] sm:$0xff]
        %v539 = vld [vmem:[%s536 + $0x10] sm:$0xff]
        %v540 = vld [vmem:[%s536 + $0x18] sm:$0xff]
        %vm541 = vcmask 261120
        %v543 = vsel %vm541, %v534, 0
        %v546 = vsel %vm541, %v535, 0
        %548 = vmatpush.msra.mxu0 0.0
        %549 = vmatpush.msra.mxu0 0.0
        %550 = vmatpush.msra.mxu0 0.0
        %551 = vmatpush.msra.mxu0 0.0
        %552 = vmatpush.msra.mxu0 0.0
        %553 = vmatpush.msra.mxu0 0.0
        %554 = vmatpush.msra.mxu0 0.0
        %555 = vmatpush.msra.mxu0 0.0
        %556 = vmatpush.msra.mxu0 0.0
        %557 = vmatpush.msra.mxu0 0.0
        %558 = vmatpush.msra.mxu0 0.0
        %559 = vmatpush.msra.mxu0 0.0
        %560 = vmatpush.msra.mxu0 %v540
        %561 = vmatpush.msra.mxu0 %v539
        %562 = vmatpush.msra.mxu0 %v538
        %563 = vmatpush.msra.mxu0 %v537
        %564 = vmatmul.f32.gmra.mxu0 %v543
        %v565 = vpop.f32.mrf.mxu0
        %v566 = vadd.f32 0.0, %v565
        %567 = vmatmul.f32.gmra.mxu0 %v546
        %v568 = vpop.f32.mrf.mxu0
        %v569 = vadd.f32 0.0, %v568
        %570 = vdwg.mxu0
        %v572 = vsel %vm541, %v528, 0
        %v575 = vsel %vm541, %v529, 0
        %577 = vmatpush.msra.mxu0 0.0
        %578 = vmatpush.msra.mxu0 0.0
        %579 = vmatpush.msra.mxu0 0.0
        %580 = vmatpush.msra.mxu0 0.0
        %581 = vmatpush.msra.mxu0 0.0
        %582 = vmatpush.msra.mxu0 0.0
        %583 = vmatpush.msra.mxu0 0.0
        %584 = vmatpush.msra.mxu0 0.0
        %585 = vmatpush.msra.mxu0 0.0
        %586 = vmatpush.msra.mxu0 0.0
        %587 = vmatpush.msra.mxu0 0.0
        %588 = vmatpush.msra.mxu0 0.0
        %589 = vmatpush.msra.mxu0 %v533
        %590 = vmatpush.msra.mxu0 %v532
        %591 = vmatpush.msra.mxu0 %v531
        %592 = vmatpush.msra.mxu0 %v530
        %593 = vmatmul.f32.gmra.mxu0 %v572
        %v594 = vpop.f32.mrf.mxu0
        %v595 = vadd.f32 %v566, %v594
        %596 = vmatmul.f32.gmra.mxu0 %v575
        %v597 = vpop.f32.mrf.mxu0
        %v598 = vadd.f32 %v569, %v597
        %599 = vdwg.mxu0
        %v600 = vld [vmem:[#allocation2 + $0x2] sm:$0xff]
        %v601 = vld [vmem:[#allocation2 + $0xa] sm:$0xff]
        %s602 = scalar_lea.vmem [#allocation9], 64
        %v603 = vld [vmem:[%s602] sm:$0xff]
        %v604 = vld [vmem:[%s602 + $0x8] sm:$0xff]
        %v605 = vld [vmem:[%s602 + $0x10] sm:$0xff]
        %v606 = vld [vmem:[%s602 + $0x18] sm:$0xff]
        %v608 = vsel %vm541, %v600, 0
        %v611 = vsel %vm541, %v601, 0
        %613 = vmatpush.msra.mxu0 0.0
        %614 = vmatpush.msra.mxu0 0.0
        %615 = vmatpush.msra.mxu0 0.0
        %616 = vmatpush.msra.mxu0 0.0
        %617 = vmatpush.msra.mxu0 0.0
        %618 = vmatpush.msra.mxu0 0.0
        %619 = vmatpush.msra.mxu0 0.0
        %620 = vmatpush.msra.mxu0 0.0
        %621 = vmatpush.msra.mxu0 0.0
        %622 = vmatpush.msra.mxu0 0.0
        %623 = vmatpush.msra.mxu0 0.0
        %624 = vmatpush.msra.mxu0 0.0
        %625 = vmatpush.msra.mxu0 %v606
        %626 = vmatpush.msra.mxu0 %v605
        %627 = vmatpush.msra.mxu0 %v604
        %628 = vmatpush.msra.mxu0 %v603
        %629 = vmatmul.f32.gmra.mxu0 %v608
        %v630 = vpop.f32.mrf.mxu0
        %v631 = vadd.f32 0.0, %v630
        %632 = vmatmul.f32.gmra.mxu0 %v611
        %v633 = vpop.f32.mrf.mxu0
        %v634 = vadd.f32 0.0, %v633
        %635 = vdwg.mxu0
        %v636 = vadd.f32 %v595, %v631
        %v637 = vadd.f32 %v598, %v634
        %v638 = vld [vmem:[%s4] sm:$0x1]
        %v640 = vperm.slane %v638, 0
        %v642 = vadd.f32 %v636, %v640
        %v643 = vadd.f32 %v637, %v640
        %v644 = vmax.f32 %v642, 0.0
        %v645 = vmax.f32 %v643, 0.0
        %v646 = vsel %vm541, %v644, 0.0
        %647 = vadd.xlane.f32.xlu0 %v646
        %v648 = vpop.xlane.xlu0 %647
        %v649 = vsel %vm541, %v645, 0.0
        %650 = vadd.xlane.f32.xlu0 %v649
        %v651 = vpop.xlane.xlu0 %650
        %v652 = vrcp.pop 32.0
        %v653 = vmul.f32 32.0, %v652
        %v654 = vsub.f32 1.0, %v653
        %v655 = vmul.f32 %v652, %v654
        %v656 = vadd.f32 %v652, %v655
        %vm657 = vweird.f32 %v652
        %v658 = vsel %vm657, %v652, %v656
        %v659 = vmul.f32 %v648, %v658
        %v660 = vmul.f32 %v651, %v658
        %v661 = vmul.f32 %v644, %v644
        %v662 = vmul.f32 %v645, %v645
        %v663 = vsel %vm541, %v661, 0.0
        %664 = vadd.xlane.f32.xlu0 %v663
        %v665 = vpop.xlane.xlu0 %664
        %v666 = vsel %vm541, %v662, 0.0
        %667 = vadd.xlane.f32.xlu0 %v666
        %v668 = vpop.xlane.xlu0 %667
        %v669 = vmul.f32 %v665, %v658
        %v670 = vmul.f32 %v668, %v658
        %v671 = vsub.f32 %v644, %v659
        %v672 = vsub.f32 %v645, %v660
        %v673 = vmul.f32 %v659, %v659
        %v674 = vmul.f32 %v660, %v660
        %v675 = vsub.f32 %v669, %v673
        %v676 = vsub.f32 %v670, %v674
        %v677 = vadd.f32 %v675, 1e-05
        %v678 = vadd.f32 %v676, 1e-05
        %v679 = vrsqrt.pop %v677
        %v680 = vmul.f32 %v679, %v677
        %v681 = vmul.f32 %v680, %v679
        %v682 = vmul.f32 0.5, %v681
        %v683 = vsub.f32 1.5, %v682
        %v684 = vmul.f32 %v679, %v683
        %vm685 = vweird.f32 %v677
        %vm686 = vweird.f32 %v679
        %vm687 = vmor %vm685, %vm686
        %v688 = vsel %vm687, %v679, %v684
        %v689 = vrsqrt.pop %v678
        %v690 = vmul.f32 %v689, %v678
        %v691 = vmul.f32 %v690, %v689
        %v692 = vmul.f32 0.5, %v691
        %v693 = vsub.f32 1.5, %v692
        %v694 = vmul.f32 %v689, %v693
        %vm695 = vweird.f32 %v678
        %vm696 = vweird.f32 %v689
        %vm697 = vmor %vm695, %vm696
        %v698 = vsel %vm697, %v689, %v694
        %v699 = vmul.f32 %v671, %v688
        %v700 = vmul.f32 %v672, %v698
        %v701 = vld [vmem:[%s5] sm:$0x1]
        %v703 = vperm.slane %v701, 0
        %v705 = vmul.f32 %v699, %v703
        %v706 = vmul.f32 %v700, %v703
        %v707 = vld [vmem:[%s6] sm:$0x1]
        %v709 = vperm.slane %v707, 0
        %v711 = vadd.f32 %v705, %v709
        %v712 = vadd.f32 %v706, %v709
        %713 = vst.msk [vmem:[#allocation3 + $0x1] sm:$0xff] %vm541, %v711
        %714 = vst.msk [vmem:[#allocation3 + $0x9] sm:$0xff] %vm541, %v712
        %v715 = vld [vmem:[#allocation3] sm:$0xff]
        %v716 = vld [vmem:[#allocation3 + $0x8] sm:$0xff]
        %v717 = vld [vmem:[#allocation11] sm:$0xff]
        %v718 = vld [vmem:[#allocation11 + $0x8] sm:$0xff]
        %v719 = vld [vmem:[#allocation11 + $0x10] sm:$0xff]
        %v720 = vld [vmem:[#allocation11 + $0x18] sm:$0xff]
        %v721 = vld [vmem:[#allocation3 + $0x1] sm:$0xff]
        %v722 = vld [vmem:[#allocation3 + $0x9] sm:$0xff]
        %s723 = scalar_lea.vmem [#allocation11], 32
        %v724 = vld [vmem:[%s723] sm:$0xff]
        %v725 = vld [vmem:[%s723 + $0x8] sm:$0xff]
        %v726 = vld [vmem:[%s723 + $0x10] sm:$0xff]
        %v727 = vld [vmem:[%s723 + $0x18] sm:$0xff]
        %v729 = vsel %vm541, %v721, 0
        %v732 = vsel %vm541, %v722, 0
        %734 = vmatpush.msra.mxu0 0.0
        %735 = vmatpush.msra.mxu0 0.0
        %736 = vmatpush.msra.mxu0 0.0
        %737 = vmatpush.msra.mxu0 0.0
        %738 = vmatpush.msra.mxu0 0.0
        %739 = vmatpush.msra.mxu0 0.0
        %740 = vmatpush.msra.mxu0 0.0
        %741 = vmatpush.msra.mxu0 0.0
        %742 = vmatpush.msra.mxu0 0.0
        %743 = vmatpush.msra.mxu0 0.0
        %744 = vmatpush.msra.mxu0 0.0
        %745 = vmatpush.msra.mxu0 0.0
        %746 = vmatpush.msra.mxu0 %v727
        %747 = vmatpush.msra.mxu0 %v726
        %748 = vmatpush.msra.mxu0 %v725
        %749 = vmatpush.msra.mxu0 %v724
        %750 = vmatmul.f32.gmra.mxu0 %v729
        %v751 = vpop.f32.mrf.mxu0
        %v752 = vadd.f32 0.0, %v751
        %753 = vmatmul.f32.gmra.mxu0 %v732
        %v754 = vpop.f32.mrf.mxu0
        %v755 = vadd.f32 0.0, %v754
        %756 = vdwg.mxu0
        %v758 = vsel %vm541, %v715, 0
        %v761 = vsel %vm541, %v716, 0
        %763 = vmatpush.msra.mxu0 0.0
        %764 = vmatpush.msra.mxu0 0.0
        %765 = vmatpush.msra.mxu0 0.0
        %766 = vmatpush.msra.mxu0 0.0
        %767 = vmatpush.msra.mxu0 0.0
        %768 = vmatpush.msra.mxu0 0.0
        %769 = vmatpush.msra.mxu0 0.0
        %770 = vmatpush.msra.mxu0 0.0
        %771 = vmatpush.msra.mxu0 0.0
        %772 = vmatpush.msra.mxu0 0.0
        %773 = vmatpush.msra.mxu0 0.0
        %774 = vmatpush.msra.mxu0 0.0
        %775 = vmatpush.msra.mxu0 %v720
        %776 = vmatpush.msra.mxu0 %v719
        %777 = vmatpush.msra.mxu0 %v718
        %778 = vmatpush.msra.mxu0 %v717
        %779 = vmatmul.f32.gmra.mxu0 %v758
        %v780 = vpop.f32.mrf.mxu0
        %v781 = vadd.f32 %v752, %v780
        %782 = vmatmul.f32.gmra.mxu0 %v761
        %v783 = vpop.f32.mrf.mxu0
        %v784 = vadd.f32 %v755, %v783
        %785 = vdwg.mxu0
        %v786 = vld [vmem:[#allocation3 + $0x2] sm:$0xff]
        %v787 = vld [vmem:[#allocation3 + $0xa] sm:$0xff]
        %s788 = scalar_lea.vmem [#allocation11], 64
        %v789 = vld [vmem:[%s788] sm:$0xff]
        %v790 = vld [vmem:[%s788 + $0x8] sm:$0xff]
        %v791 = vld [vmem:[%s788 + $0x10] sm:$0xff]
        %v792 = vld [vmem:[%s788 + $0x18] sm:$0xff]
        %v794 = vsel %vm541, %v786, 0
        %v797 = vsel %vm541, %v787, 0
        %799 = vmatpush.msra.mxu0 0.0
        %800 = vmatpush.msra.mxu0 0.0
        %801 = vmatpush.msra.mxu0 0.0
        %802 = vmatpush.msra.mxu0 0.0
        %803 = vmatpush.msra.mxu0 0.0
        %804 = vmatpush.msra.mxu0 0.0
        %805 = vmatpush.msra.mxu0 0.0
        %806 = vmatpush.msra.mxu0 0.0
        %807 = vmatpush.msra.mxu0 0.0
        %808 = vmatpush.msra.mxu0 0.0
        %809 = vmatpush.msra.mxu0 0.0
        %810 = vmatpush.msra.mxu0 0.0
        %811 = vmatpush.msra.mxu0 %v792
        %812 = vmatpush.msra.mxu0 %v791
        %813 = vmatpush.msra.mxu0 %v790
        %814 = vmatpush.msra.mxu0 %v789
        %815 = vmatmul.f32.gmra.mxu0 %v794
        %v816 = vpop.f32.mrf.mxu0
        %v817 = vadd.f32 0.0, %v816
        %818 = vmatmul.f32.gmra.mxu0 %v797
        %v819 = vpop.f32.mrf.mxu0
        %v820 = vadd.f32 0.0, %v819
        %821 = vdwg.mxu0
        %v822 = vadd.f32 %v781, %v817
        %v823 = vadd.f32 %v784, %v820
        %v824 = vld [vmem:[%s8] sm:$0x1]
        %v826 = vperm.slane %v824, 0
        %v828 = vadd.f32 %v822, %v826
        %v829 = vadd.f32 %v823, %v826
        %v830 = vmax.f32 %v828, 0.0
        %v831 = vmax.f32 %v829, 0.0
        %v832 = vsel %vm541, %v830, 0.0
        %833 = vadd.xlane.f32.xlu0 %v832
        %v834 = vpop.xlane.xlu0 %833
        %v835 = vsel %vm541, %v831, 0.0
        %836 = vadd.xlane.f32.xlu0 %v835
        %v837 = vpop.xlane.xlu0 %836
        %v838 = vmul.f32 %v834, %v658
        %v839 = vmul.f32 %v837, %v658
        %v840 = vmul.f32 %v830, %v830
        %v841 = vmul.f32 %v831, %v831
        %v842 = vsel %vm541, %v840, 0.0
        %843 = vadd.xlane.f32.xlu0 %v842
        %v844 = vpop.xlane.xlu0 %843
        %v845 = vsel %vm541, %v841, 0.0
        %846 = vadd.xlane.f32.xlu0 %v845
        %v847 = vpop.xlane.xlu0 %846
        %v848 = vmul.f32 %v844, %v658
        %v849 = vmul.f32 %v847, %v658
        %v850 = vsub.f32 %v830, %v838
        %v851 = vsub.f32 %v831, %v839
        %v852 = vmul.f32 %v838, %v838
        %v853 = vmul.f32 %v839, %v839
        %v854 = vsub.f32 %v848, %v852
        %v855 = vsub.f32 %v849, %v853
        %v856 = vadd.f32 %v854, 1e-05
        %v857 = vadd.f32 %v855, 1e-05
        %v858 = vrsqrt.pop %v856
        %v859 = vmul.f32 %v858, %v856
        %v860 = vmul.f32 %v859, %v858
        %v861 = vmul.f32 0.5, %v860
        %v862 = vsub.f32 1.5, %v861
        %v863 = vmul.f32 %v858, %v862
        %vm864 = vweird.f32 %v856
        %vm865 = vweird.f32 %v858
        %vm866 = vmor %vm864, %vm865
        %v867 = vsel %vm866, %v858, %v863
        %v868 = vrsqrt.pop %v857
        %v869 = vmul.f32 %v868, %v857
        %v870 = vmul.f32 %v869, %v868
        %v871 = vmul.f32 0.5, %v870
        %v872 = vsub.f32 1.5, %v871
        %v873 = vmul.f32 %v868, %v872
        %vm874 = vweird.f32 %v857
        %vm875 = vweird.f32 %v868
        %vm876 = vmor %vm874, %vm875
        %v877 = vsel %vm876, %v868, %v873
        %v878 = vmul.f32 %v850, %v867
        %v879 = vmul.f32 %v851, %v877
        %v880 = vld [vmem:[%s9] sm:$0x1]
        %v882 = vperm.slane %v880, 0
        %v884 = vmul.f32 %v878, %v882
        %v885 = vmul.f32 %v879, %v882
        %v886 = vld [vmem:[%s10] sm:$0x1]
        %v888 = vperm.slane %v886, 0
        %v890 = vadd.f32 %v884, %v888
        %v891 = vadd.f32 %v885, %v888
        %v892 = vld [vmem:[%s11] sm:$0x1]
        %v894 = vperm.slane %v892, 0
        %v896 = vmul.f32 %v890, %v894
        %v897 = vmul.f32 %v891, %v894
        %v898 = vsel %vm541, %v896, 0.0
        %899 = vadd.xlane.f32.xlu0 %v898
        %v900 = vpop.xlane.xlu0 %899
        %v901 = vsel %vm541, %v897, 0.0
        %902 = vadd.xlane.f32.xlu0 %v901
        %v903 = vpop.xlane.xlu0 %902
        %s904 = sld [smem:[#allocation5]]
        %v905 = vstv %s904
        %v906 = vadd.f32 %v900, %v905
        %v907 = vadd.f32 %v903, %v905
        %v908 = vld [vmem:[%s508] sm:$0x1]
        %vm909 = vcmp.gt.f32.partialorder %v908, 0.5
        %v912 = vperm.slane %v906, 0
        %v913 = vperm.slane %v906, 1
        %v914 = vperm.slane %v906, 2
        %v915 = vperm.slane %v906, 3
        %v916 = vperm.slane %v906, 4
        %v917 = vperm.slane %v906, 5
        %v918 = vperm.slane %v906, 6
        %v919 = vperm.slane %v906, 7
        %v920 = vperm.slane %v907, 0
        %v921 = vperm.slane %v907, 1
        %v922 = vperm.slane %v907, 2
        %v923 = vperm.slane %v907, 3
        %v924 = vperm.slane %v907, 4
        %v925 = vperm.slane %v907, 5
        %v926 = vperm.slane %v907, 6
        %v927 = vperm.slane %v907, 7
        %928 = vst [vmem:[#allocation1] ss:$9 sm:$0xff] %v912
        %s929 = scalar_lea.vmem [#allocation1], 1
        %930 = vst [vmem:[%s929] ss:$9 sm:$0xff] %v913
        %s931 = scalar_lea.vmem [#allocation1], 2
        %932 = vst [vmem:[%s931] ss:$9 sm:$0xff] %v914
        %s933 = scalar_lea.vmem [#allocation1], 3
        %934 = vst [vmem:[%s933] ss:$9 sm:$0xff] %v915
        %s935 = scalar_lea.vmem [#allocation1], 4
        %936 = vst [vmem:[%s935] ss:$9 sm:$0xff] %v916
        %s937 = scalar_lea.vmem [#allocation1], 5
        %938 = vst [vmem:[%s937] ss:$9 sm:$0xff] %v917
        %s939 = scalar_lea.vmem [#allocation1], 6
        %940 = vst [vmem:[%s939] ss:$9 sm:$0xff] %v918
        %s941 = scalar_lea.vmem [#allocation1], 7
        %942 = vst [vmem:[%s941] ss:$9 sm:$0xff] %v919
        %v943 = vld [vmem:[#allocation1] sm:$0xff]
        %944 = vst [vmem:[#allocation1] ss:$9 sm:$0xff] %v920
        %945 = vst [vmem:[%s929] ss:$9 sm:$0xff] %v921
        %946 = vst [vmem:[%s931] ss:$9 sm:$0xff] %v922
        %947 = vst [vmem:[%s933] ss:$9 sm:$0xff] %v923
        %948 = vst [vmem:[%s935] ss:$9 sm:$0xff] %v924
        %949 = vst [vmem:[%s937] ss:$9 sm:$0xff] %v925
        %950 = vst [vmem:[%s939] ss:$9 sm:$0xff] %v926
        %951 = vst [vmem:[%s941] ss:$9 sm:$0xff] %v927
        %v952 = vld [vmem:[#allocation1] sm:$0xff]
        %953 = vset.pattern.permute.xlu0 0
        %954 = vperm.xlu0 %953, %v943
        %v955 = vpop.permute.xlu0 %954
        %956 = vset.pattern.permute.xlu0 0
        %957 = vperm.xlu0 %956, %v952
        %v958 = vpop.permute.xlu0 %957
        %v959 = vlaneseq
        %v960 = vand.u32 %v959, 127
        %v961 = vperm.slane %v955, %v960
        %v962 = vadd.s32 %v960, 4294967288
        %v963 = vperm.slane %v958, %v962
        %vm964 = vcmask 130112
        %v965 = vsel %vm964, %v963, %v961
        %v967 = vsel %vm909, 0.0, %v965
        %vm968 = vcmask 122880
        %969 = vst.msk [vmem:[%s505] sm:$0x1] %vm968, %v967
        %s970 = sand.u32 %s324, 1
        %s971 = scalar_lea.sflag [#allocation8], %s970
        %s972 = sand.u32 %s324, 1
        %s973 = scalar_lea.vmem [#allocation12], %s972
        // Predicated region
        $region89: #{tpu_custom_call.1} parent=71 // pred_check
          %p974 = pneg %p334
        $region90: #{tpu_custom_call.1} parent=71 // pred_check_branch
          %976 = sbr.rel (%p974) target = $region92
        $region91: #{tpu_custom_call.1} parent=71 // pred_region
          %978 = vsyncadd %s971, 0
          %s979 = scalar_lea.hbm %s13, %s33
          %s981 = sshll.u32 %s973, 4
          %s982 = int_to_ptr.vmem [resolvable:$true] %s981
          %s983 = sshll.u32 %s979, 4
          %s984 = int_to_ptr.hbm [resolvable:$true] %s983
          %986 = dma.vmem_to_hbm [thread:$0]  %s982, 16, %s984, %s971
        $region92: #{tpu_custom_call.1} parent=71 // pred_fallthru
          _
      $region72: #{tpu_custom_call.1} parent=5 // pred_fallthru
        _
      %p987 = scmp.le.s32.totalorder 2, %s28
      // Predicated region
      $region93: #{tpu_custom_call.1} parent=5 // pred_check
        %p988 = pneg %p987
      $region94: #{tpu_custom_call.1} parent=5 // pred_check_branch
        %990 = sbr.rel (%p988) target = $region96
      $region95: #{tpu_custom_call.1} parent=5 // pred_region
        %s991 = ssub.s32 %s28, 2
        // Predicated region
        $region97: #{tpu_custom_call.1} parent=95 // pred_check
          %p992 = pneg %p340
        $region98: #{tpu_custom_call.1} parent=95 // pred_check_branch
          %994 = sbr.rel (%p992) target = $region100
        $region99: #{tpu_custom_call.1} parent=95 // pred_region
          %s995 = sand.u32 %s325, 1
          %s996 = scalar_lea.sflag [#allocation8], %s995
          %s997 = sand.u32 %s325, 1
          %s998 = scalar_lea.vmem [#allocation12], %s997
          %1000 = dma.done %s996, 16
        $region100: #{tpu_custom_call.1} parent=95 // pred_fallthru
          _
      $region96: #{tpu_custom_call.1} parent=5 // pred_fallthru
        _
    $region6: #{tpu_custom_call.1} parent=1 // loop_footer
      %s32 = sadd.s32 1, %s28
    $region7: #{tpu_custom_call.1} parent=1 // loop_footer_branch
      %27 = sbr.rel target = $region3
    $region8: #{tpu_custom_call.1} parent=1 // loop_exit
      _
    %1001 = vsyncpa [#allocation7], 1
    %s1002 = scalar_lea.sflag [#allocation7], 1
    %1003 = vsyncpa %s1002, 1
    %1004 = vsyncpa [#allocation10], 1
    %1005 = vsyncpa [#allocation8], 1
    %s1006 = scalar_lea.sflag [#allocation8], 1
    %1007 = vsyncpa %s1006, 1

</llo_original>
